<compile_context>
chip_gen: v6e
topology: v6e:2x2x1
jax: 0.10.0
libtpu: 0.0.40
codegen_flags: <defaults>
</compile_context>

<pallas_src>
import jax
import jax.numpy as jnp
from jax.experimental import pallas as pl
from jax.experimental.pallas import tpu as pltpu


def se_conv_kernel(se_ref, w1_ref, b1_ref, x_ref, w2_ref, o_ref):
    # se_ref: [1, 20]      SE input (x158)
    # w1_ref: [480, 20]    conv2d52 weight (channel-major, no transpose)
    # b1_ref: [480, 1]     conv2d52 bias
    # x_ref:  [480, 196]   x155 flattened channel-major (C, H*W)
    # w2_ref: [80, 480]    conv2d53 weight (channel-major, no transpose)
    # o_ref:  [80, 196]    output (C_out, H*W) -- lane-dense
    #
    # Tiny SE projection: broadcast-multiply + lane reduce (VPU+XLU), avoids a
    # degenerate N=1 matmul on the MXU.
    s = jnp.sum(w1_ref[...] * se_ref[...], axis=1, keepdims=True) + b1_ref[...]  # [480,1]
    gate = jax.nn.sigmoid(s)                                                      # EUP exp path
    gated = x_ref[...] * gate                                                     # lane-broadcast [480,196]
    # Dominant matmul on the MXU: [80,480] x [480,196] -> [80,196].
    o_ref[...] = jnp.dot(w2_ref[...], gated, preferred_element_type=jnp.float32)


def se_conv_pallas(x155, x158, w52, b52, w53):
    """x155: [1,480,14,14], x158: [1,20,1,1] (NCHW, f32). Returns [1,80,14,14]."""
    N, C_mid, H, W = x155.shape           # 1, 480, 14, 14
    C_se = x158.shape[1]                  # 20
    C_out = w53.shape[0]                  # 80
    HW = H * W                            # 196

    # All reshapes below are metadata-only (no transposes -> no extra HBM traffic).
    x_flat = x155.reshape(C_mid, HW)      # [480, 196]
    se_vec = x158.reshape(1, C_se)        # [1, 20]
    w1 = w52.reshape(C_mid, C_se)         # [480, 20]
    b1 = b52.reshape(C_mid, 1)            # [480, 1]
    w2 = w53.reshape(C_out, C_mid)        # [80, 480]
    # TODO(synk): if the surrounding model tolerates bf16 activations/weights,
    # feed x_flat/w2 as bf16 here (accumulate in f32 inside the kernel) for a
    # ~2x HBM-traffic cut; kept f32 to preserve the module's exact semantics.

    full = lambda shp: pl.BlockSpec(shp, lambda: tuple(0 for _ in shp))
    bytes_accessed = 4 * (x_flat.size + se_vec.size + w1.size + b1.size
                          + w2.size + HW * C_out)
    out_flat = pl.pallas_call(
        se_conv_kernel,
        out_shape=jax.ShapeDtypeStruct((C_out, HW), jnp.float32),
        grid=(),
        in_specs=[
            full((1, C_se)),
            full((C_mid, C_se)),
            full((C_mid, 1)),
            full((C_mid, HW)),
            full((C_out, C_mid)),
        ],
        out_specs=full((C_out, HW)),
        cost_estimate=pl.CostEstimate(
            flops=2 * HW * C_mid * C_out + 2 * C_mid * C_se,
            bytes_accessed=bytes_accessed,
            transcendentals=C_mid,
        ),
    )(se_vec, w1, b1, x_flat, w2)

    # Free reshape back to NCHW.
    return out_flat.reshape(1, C_out, H, W)


se_conv_pallas_jit = jax.jit(se_conv_pallas)


def reference(x155, x158, w52, b52, w53):
    # Pure-JAX reference of the PyTorch forward (1x1 convs == matmuls).
    C_mid, C_se = w52.shape[0], w52.shape[1]
    C_out = w53.shape[0]
    s = jnp.einsum('oc,nchw->nohw', w52.reshape(C_mid, C_se), x158) \
        + b52[None, :, None, None]
    g = jax.nn.sigmoid(s) * x155
    return jnp.einsum('oc,nchw->nohw', w53.reshape(C_out, C_mid), g)


if __name__ == "__main__":
    key = jax.random.PRNGKey(0)
    k1, k2, k3, k4, k5 = jax.random.split(key, 5)

    # Inputs (same shapes as the module's example tensors).
    x155 = jax.random.normal(k1, (1, 480, 14, 14), dtype=jnp.float32)
    x158 = jax.random.normal(k2, (1, 20, 1, 1), dtype=jnp.float32)

    # Deterministic parameter init (shapes from Conv2d defs in __init__).
    w52 = 0.1 * jax.random.normal(k3, (480, 20, 1, 1), dtype=jnp.float32)
    b52 = 0.1 * jax.random.normal(k4, (480,), dtype=jnp.float32)
    w53 = 0.05 * jax.random.normal(k5, (80, 480, 1, 1), dtype=jnp.float32)

    out = jax.block_until_ready(se_conv_pallas_jit(x155, x158, w52, b52, w53))
    ref = jax.block_until_ready(reference(x155, x158, w52, b52, w53))

    assert out.shape == (1, 80, 14, 14), out.shape
    assert jnp.allclose(out, ref, atol=1e-3, rtol=1e-3), float(jnp.max(jnp.abs(out - ref)))
    print("KERNEL_OK")
</pallas_src>

<mosaic_0001>
module attributes {stable_mosaic.version = 11 : i64} {
  func.func @se_conv_kernel(%arg0: memref<1x20xf32, #tpu.memory_space<vmem>>, %arg1: memref<480x20xf32, #tpu.memory_space<vmem>>, %arg2: memref<480x1xf32, #tpu.memory_space<vmem>>, %arg3: memref<480x196xf32, #tpu.memory_space<vmem>>, %arg4: memref<80x480xf32, #tpu.memory_space<vmem>>, %arg5: memref<80x196xf32, #tpu.memory_space<vmem>>) attributes {dimension_semantics = [], scalar_prefetch = 0 : i64, scratch_operands = 0 : i64, tpu.core_type = #tpu.core_type<tc>} {
    %c0 = arith.constant 0 : index
    %c0_0 = arith.constant 0 : index
    %0 = vector.load %arg1[%c0, %c0_0] : memref<480x20xf32, #tpu.memory_space<vmem>>, vector<480x20xf32>
    %c0_1 = arith.constant 0 : index
    %c0_2 = arith.constant 0 : index
    %1 = vector.load %arg0[%c0_1, %c0_2] : memref<1x20xf32, #tpu.memory_space<vmem>>, vector<1x20xf32>
    %2 = vector.broadcast %1 : vector<1x20xf32> to vector<480x20xf32>
    %3 = arith.mulf %0, %2 : vector<480x20xf32>
    %cst = arith.constant dense<0.000000e+00> : vector<480xf32>
    %4 = vector.multi_reduction <add>, %3, %cst [1] : vector<480x20xf32> to vector<480xf32>
    %5 = vector.shape_cast %4 : vector<480xf32> to vector<480x1xf32>
    %c0_3 = arith.constant 0 : index
    %c0_4 = arith.constant 0 : index
    %6 = vector.load %arg2[%c0_3, %c0_4] : memref<480x1xf32, #tpu.memory_space<vmem>>, vector<480x1xf32>
    %7 = arith.addf %5, %6 : vector<480x1xf32>
    %8 = arith.negf %7 : vector<480x1xf32>
    %9 = math.exp %8 : vector<480x1xf32>
    %cst_5 = arith.constant 1.000000e+00 : f32
    %10 = vector.broadcast %cst_5 : f32 to vector<480x1xf32>
    %11 = arith.addf %10, %9 : vector<480x1xf32>
    %12 = arith.divf %10, %11 : vector<480x1xf32>
    %c0_6 = arith.constant 0 : index
    %c0_7 = arith.constant 0 : index
    %13 = vector.load %arg3[%c0_6, %c0_7] : memref<480x196xf32, #tpu.memory_space<vmem>>, vector<480x196xf32>
    %14 = vector.broadcast %12 : vector<480x1xf32> to vector<480x196xf32>
    %15 = arith.mulf %13, %14 : vector<480x196xf32>
    %c0_8 = arith.constant 0 : index
    %c0_9 = arith.constant 0 : index
    %16 = vector.load %arg4[%c0_8, %c0_9] : memref<80x480xf32, #tpu.memory_space<vmem>>, vector<80x480xf32>
    %cst_10 = arith.constant dense<0.000000e+00> : vector<80x196xf32>
    %17 = tpu.matmul %16, %15, %cst_10 {dimension_numbers = #tpu.dot_dimension_numbers<[1], [0], [0], [1], [0, 0, 1, 1], [], []>} : vector<80x480xf32>, vector<480x196xf32>, vector<80x196xf32> -> vector<80x196xf32>
    %c0_11 = arith.constant 0 : index
    %c0_12 = arith.constant 0 : index
    %18 = vector.load %arg5[%c0_11, %c0_12] : memref<80x196xf32, #tpu.memory_space<vmem>>, vector<80x196xf32>
    tpu.vector_store %arg5[%c0_11, %c0_12], %17 {strides = array<i32>} : memref<80x196xf32, #tpu.memory_space<vmem>>, vector<80x196xf32>,
    return
  }
}

</mosaic_0001>

<llo_original>
// kernel: se_conv_pallas.1
$region0: #{se_conv_pallas.1}
  #allocation0 [shape = 'u32[]', space=smem, size = 0x4, offset = 0x4, fixed_abs, tag = 'smem constant byte address 0x4 - core index']
  #allocation1 [shape = 'u32[144,128]{1,0:T(1,128)}', space=vmem, size = 0x12000, scoped, tag = 'internal scratch']
  %s0 = inlined_call_operand.vmem [shape: f32[1,20], index: 0, kind: input, shape index: {}]
  %s1 = inlined_call_operand.vmem [shape: f32[480,20], index: 1, kind: input, shape index: {}]
  %s2 = inlined_call_operand.vmem [shape: f32[480,1], index: 2, kind: input, shape index: {}]
  %s3 = inlined_call_operand.vmem [shape: f32[480,196], index: 3, kind: input, shape index: {}]
  %s4 = inlined_call_operand.vmem [shape: f32[80,480], index: 4, kind: input, shape index: {}]
  %s5 = inlined_call_operand.vmem [shape: f32[80,196], index: 5, kind: output, shape index: {}]
  %s6 = sld [smem:[#allocation0]]
  $region30: #{se_conv_pallas.1} parent=0
    _
  %s8 = ssub.s32 1, %s6
  %s9 = scalar_select 0, %s8, %s6
  // Predicated region
  $region2: #{se_conv_pallas.1} parent=0 // pred_check
    _
  $region3: #{se_conv_pallas.1} parent=0 // pred_check_branch
    %11 = sbr.rel (0) target = $region5
  $region4: #{se_conv_pallas.1} parent=0 // pred_region
    _
  $region5: #{se_conv_pallas.1} parent=0 // pred_fallthru
    _
  // Predicated region
  $region6: #{se_conv_pallas.1} parent=0 // pred_check
    _
  $region7: #{se_conv_pallas.1} parent=0 // pred_check_branch
    %13 = sbr.rel (0) target = $region9
  $region8: #{se_conv_pallas.1} parent=0 // pred_region
    _
  $region9: #{se_conv_pallas.1} parent=0 // pred_fallthru
    _
  // Predicated region
  $region10: #{se_conv_pallas.1} parent=0 // pred_check
    _
  $region11: #{se_conv_pallas.1} parent=0 // pred_check_branch
    %15 = sbr.rel (0) target = $region13
  $region12: #{se_conv_pallas.1} parent=0 // pred_region
    _
  $region13: #{se_conv_pallas.1} parent=0 // pred_fallthru
    _
  // Predicated region
  $region14: #{se_conv_pallas.1} parent=0 // pred_check
    _
  $region15: #{se_conv_pallas.1} parent=0 // pred_check_branch
    %17 = sbr.rel (0) target = $region17
  $region16: #{se_conv_pallas.1} parent=0 // pred_region
    _
  $region17: #{se_conv_pallas.1} parent=0 // pred_fallthru
    _
  // Predicated region
  $region18: #{se_conv_pallas.1} parent=0 // pred_check
    _
  $region19: #{se_conv_pallas.1} parent=0 // pred_check_branch
    %19 = sbr.rel (0) target = $region21
  $region20: #{se_conv_pallas.1} parent=0 // pred_region
    _
  $region21: #{se_conv_pallas.1} parent=0 // pred_fallthru
    _
  %v20 = vld [vmem:[%s1] sm:$0xff]
  %v21 = vld [vmem:[%s1 + $0x8] sm:$0xff]
  %v22 = vld [vmem:[%s1 + $0x10] sm:$0xff]
  %v23 = vld [vmem:[%s1 + $0x18] sm:$0xff]
  %v24 = vld [vmem:[%s1 + $0x20] sm:$0xff]
  %v25 = vld [vmem:[%s1 + $0x28] sm:$0xff]
  %v26 = vld [vmem:[%s1 + $0x30] sm:$0xff]
  %v27 = vld [vmem:[%s1 + $0x38] sm:$0xff]
  %v28 = vld [vmem:[%s1 + $0x40] sm:$0xff]
  %v29 = vld [vmem:[%s1 + $0x48] sm:$0xff]
  %v30 = vld [vmem:[%s1 + $0x50] sm:$0xff]
  %v31 = vld [vmem:[%s1 + $0x58] sm:$0xff]
  %v32 = vld [vmem:[%s1 + $0x60] sm:$0xff]
  %v33 = vld [vmem:[%s1 + $0x68] sm:$0xff]
  %v34 = vld [vmem:[%s1 + $0x70] sm:$0xff]
  %v35 = vld [vmem:[%s1 + $0x78] sm:$0xff]
  %v36 = vld [vmem:[%s1 + $0x80] sm:$0xff]
  %v37 = vld [vmem:[%s1 + $0x88] sm:$0xff]
  %v38 = vld [vmem:[%s1 + $0x90] sm:$0xff]
  %v39 = vld [vmem:[%s1 + $0x98] sm:$0xff]
  %v40 = vld [vmem:[%s1 + $0xa0] sm:$0xff]
  %v41 = vld [vmem:[%s1 + $0xa8] sm:$0xff]
  %v42 = vld [vmem:[%s1 + $0xb0] sm:$0xff]
  %v43 = vld [vmem:[%s1 + $0xb8] sm:$0xff]
  %v44 = vld [vmem:[%s1 + $0xc0] sm:$0xff]
  %v45 = vld [vmem:[%s1 + $0xc8] sm:$0xff]
  %v46 = vld [vmem:[%s1 + $0xd0] sm:$0xff]
  %v47 = vld [vmem:[%s1 + $0xd8] sm:$0xff]
  %v48 = vld [vmem:[%s1 + $0xe0] sm:$0xff]
  %v49 = vld [vmem:[%s1 + $0xe8] sm:$0xff]
  %v50 = vld [vmem:[%s1 + $0xf0] sm:$0xff]
  %v51 = vld [vmem:[%s1 + $0xf8] sm:$0xff]
  %v52 = vld [vmem:[%s1 + $0x100] sm:$0xff]
  %v53 = vld [vmem:[%s1 + $0x108] sm:$0xff]
  %v54 = vld [vmem:[%s1 + $0x110] sm:$0xff]
  %v55 = vld [vmem:[%s1 + $0x118] sm:$0xff]
  %v56 = vld [vmem:[%s1 + $0x120] sm:$0xff]
  %v57 = vld [vmem:[%s1 + $0x128] sm:$0xff]
  %v58 = vld [vmem:[%s1 + $0x130] sm:$0xff]
  %v59 = vld [vmem:[%s1 + $0x138] sm:$0xff]
  %v60 = vld [vmem:[%s1 + $0x140] sm:$0xff]
  %v61 = vld [vmem:[%s1 + $0x148] sm:$0xff]
  %v62 = vld [vmem:[%s1 + $0x150] sm:$0xff]
  %v63 = vld [vmem:[%s1 + $0x158] sm:$0xff]
  %v64 = vld [vmem:[%s1 + $0x160] sm:$0xff]
  %v65 = vld [vmem:[%s1 + $0x168] sm:$0xff]
  %v66 = vld [vmem:[%s1 + $0x170] sm:$0xff]
  %v67 = vld [vmem:[%s1 + $0x178] sm:$0xff]
  %v68 = vld [vmem:[%s1 + $0x180] sm:$0xff]
  %v69 = vld [vmem:[%s1 + $0x188] sm:$0xff]
  %v70 = vld [vmem:[%s1 + $0x190] sm:$0xff]
  %v71 = vld [vmem:[%s1 + $0x198] sm:$0xff]
  %v72 = vld [vmem:[%s1 + $0x1a0] sm:$0xff]
  %v73 = vld [vmem:[%s1 + $0x1a8] sm:$0xff]
  %v74 = vld [vmem:[%s1 + $0x1b0] sm:$0xff]
  %v75 = vld [vmem:[%s1 + $0x1b8] sm:$0xff]
  %v76 = vld [vmem:[%s1 + $0x1c0] sm:$0xff]
  %v77 = vld [vmem:[%s1 + $0x1c8] sm:$0xff]
  %v78 = vld [vmem:[%s1 + $0x1d0] sm:$0xff]
  %v79 = vld [vmem:[%s1 + $0x1d8] sm:$0xff]
  %v80 = vld [vmem:[%s0] sm:$0x1]
  %v82 = vlaneseq
  %v83 = vshrl.u32 %v82, 7
  %v84 = vsub.s32 0, %v83
  %v85 = vrot.slane %v80, %v84
  %v87 = vmul.f32 %v20, %v85
  %v88 = vmul.f32 %v21, %v85
  %v89 = vmul.f32 %v22, %v85
  %v90 = vmul.f32 %v23, %v85
  %v91 = vmul.f32 %v24, %v85
  %v92 = vmul.f32 %v25, %v85
  %v93 = vmul.f32 %v26, %v85
  %v94 = vmul.f32 %v27, %v85
  %v95 = vmul.f32 %v28, %v85
  %v96 = vmul.f32 %v29, %v85
  %v97 = vmul.f32 %v30, %v85
  %v98 = vmul.f32 %v31, %v85
  %v99 = vmul.f32 %v32, %v85
  %v100 = vmul.f32 %v33, %v85
  %v101 = vmul.f32 %v34, %v85
  %v102 = vmul.f32 %v35, %v85
  %v103 = vmul.f32 %v36, %v85
  %v104 = vmul.f32 %v37, %v85
  %v105 = vmul.f32 %v38, %v85
  %v106 = vmul.f32 %v39, %v85
  %v107 = vmul.f32 %v40, %v85
  %v108 = vmul.f32 %v41, %v85
  %v109 = vmul.f32 %v42, %v85
  %v110 = vmul.f32 %v43, %v85
  %v111 = vmul.f32 %v44, %v85
  %v112 = vmul.f32 %v45, %v85
  %v113 = vmul.f32 %v46, %v85
  %v114 = vmul.f32 %v47, %v85
  %v115 = vmul.f32 %v48, %v85
  %v116 = vmul.f32 %v49, %v85
  %v117 = vmul.f32 %v50, %v85
  %v118 = vmul.f32 %v51, %v85
  %v119 = vmul.f32 %v52, %v85
  %v120 = vmul.f32 %v53, %v85
  %v121 = vmul.f32 %v54, %v85
  %v122 = vmul.f32 %v55, %v85
  %v123 = vmul.f32 %v56, %v85
  %v124 = vmul.f32 %v57, %v85
  %v125 = vmul.f32 %v58, %v85
  %v126 = vmul.f32 %v59, %v85
  %v127 = vmul.f32 %v60, %v85
  %v128 = vmul.f32 %v61, %v85
  %v129 = vmul.f32 %v62, %v85
  %v130 = vmul.f32 %v63, %v85
  %v131 = vmul.f32 %v64, %v85
  %v132 = vmul.f32 %v65, %v85
  %v133 = vmul.f32 %v66, %v85
  %v134 = vmul.f32 %v67, %v85
  %v135 = vmul.f32 %v68, %v85
  %v136 = vmul.f32 %v69, %v85
  %v137 = vmul.f32 %v70, %v85
  %v138 = vmul.f32 %v71, %v85
  %v139 = vmul.f32 %v72, %v85
  %v140 = vmul.f32 %v73, %v85
  %v141 = vmul.f32 %v74, %v85
  %v142 = vmul.f32 %v75, %v85
  %v143 = vmul.f32 %v76, %v85
  %v144 = vmul.f32 %v77, %v85
  %v145 = vmul.f32 %v78, %v85
  %v146 = vmul.f32 %v79, %v85
  %vm147 = vcmask 162816
  %v148 = vsel %vm147, %v87, 0.0
  %149 = vadd.xlane.f32.xlu0 %v148
  %v150 = vpop.xlane.xlu0 %149
  %v151 = vsel %vm147, %v88, 0.0
  %152 = vadd.xlane.f32.xlu0 %v151
  %v153 = vpop.xlane.xlu0 %152
  %v154 = vsel %vm147, %v89, 0.0
  %155 = vadd.xlane.f32.xlu0 %v154
  %v156 = vpop.xlane.xlu0 %155
  %v157 = vsel %vm147, %v90, 0.0
  %158 = vadd.xlane.f32.xlu0 %v157
  %v159 = vpop.xlane.xlu0 %158
  %v160 = vsel %vm147, %v91, 0.0
  %161 = vadd.xlane.f32.xlu0 %v160
  %v162 = vpop.xlane.xlu0 %161
  %v163 = vsel %vm147, %v92, 0.0
  %164 = vadd.xlane.f32.xlu0 %v163
  %v165 = vpop.xlane.xlu0 %164
  %v166 = vsel %vm147, %v93, 0.0
  %167 = vadd.xlane.f32.xlu0 %v166
  %v168 = vpop.xlane.xlu0 %167
  %v169 = vsel %vm147, %v94, 0.0
  %170 = vadd.xlane.f32.xlu0 %v169
  %v171 = vpop.xlane.xlu0 %170
  %v172 = vsel %vm147, %v95, 0.0
  %173 = vadd.xlane.f32.xlu0 %v172
  %v174 = vpop.xlane.xlu0 %173
  %v175 = vsel %vm147, %v96, 0.0
  %176 = vadd.xlane.f32.xlu0 %v175
  %v177 = vpop.xlane.xlu0 %176
  %v178 = vsel %vm147, %v97, 0.0
  %179 = vadd.xlane.f32.xlu0 %v178
  %v180 = vpop.xlane.xlu0 %179
  %v181 = vsel %vm147, %v98, 0.0
  %182 = vadd.xlane.f32.xlu0 %v181
  %v183 = vpop.xlane.xlu0 %182
  %v184 = vsel %vm147, %v99, 0.0
  %185 = vadd.xlane.f32.xlu0 %v184
  %v186 = vpop.xlane.xlu0 %185
  %v187 = vsel %vm147, %v100, 0.0
  %188 = vadd.xlane.f32.xlu0 %v187
  %v189 = vpop.xlane.xlu0 %188
  %v190 = vsel %vm147, %v101, 0.0
  %191 = vadd.xlane.f32.xlu0 %v190
  %v192 = vpop.xlane.xlu0 %191
  %v193 = vsel %vm147, %v102, 0.0
  %194 = vadd.xlane.f32.xlu0 %v193
  %v195 = vpop.xlane.xlu0 %194
  %v196 = vsel %vm147, %v103, 0.0
  %197 = vadd.xlane.f32.xlu0 %v196
  %v198 = vpop.xlane.xlu0 %197
  %v199 = vsel %vm147, %v104, 0.0
  %200 = vadd.xlane.f32.xlu0 %v199
  %v201 = vpop.xlane.xlu0 %200
  %v202 = vsel %vm147, %v105, 0.0
  %203 = vadd.xlane.f32.xlu0 %v202
  %v204 = vpop.xlane.xlu0 %203
  %v205 = vsel %vm147, %v106, 0.0
  %206 = vadd.xlane.f32.xlu0 %v205
  %v207 = vpop.xlane.xlu0 %206
  %v208 = vsel %vm147, %v107, 0.0
  %209 = vadd.xlane.f32.xlu0 %v208
  %v210 = vpop.xlane.xlu0 %209
  %v211 = vsel %vm147, %v108, 0.0
  %212 = vadd.xlane.f32.xlu0 %v211
  %v213 = vpop.xlane.xlu0 %212
  %v214 = vsel %vm147, %v109, 0.0
  %215 = vadd.xlane.f32.xlu0 %v214
  %v216 = vpop.xlane.xlu0 %215
  %v217 = vsel %vm147, %v110, 0.0
  %218 = vadd.xlane.f32.xlu0 %v217
  %v219 = vpop.xlane.xlu0 %218
  %v220 = vsel %vm147, %v111, 0.0
  %221 = vadd.xlane.f32.xlu0 %v220
  %v222 = vpop.xlane.xlu0 %221
  %v223 = vsel %vm147, %v112, 0.0
  %224 = vadd.xlane.f32.xlu0 %v223
  %v225 = vpop.xlane.xlu0 %224
  %v226 = vsel %vm147, %v113, 0.0
  %227 = vadd.xlane.f32.xlu0 %v226
  %v228 = vpop.xlane.xlu0 %227
  %v229 = vsel %vm147, %v114, 0.0
  %230 = vadd.xlane.f32.xlu0 %v229
  %v231 = vpop.xlane.xlu0 %230
  %v232 = vsel %vm147, %v115, 0.0
  %233 = vadd.xlane.f32.xlu0 %v232
  %v234 = vpop.xlane.xlu0 %233
  %v235 = vsel %vm147, %v116, 0.0
  %236 = vadd.xlane.f32.xlu0 %v235
  %v237 = vpop.xlane.xlu0 %236
  %v238 = vsel %vm147, %v117, 0.0
  %239 = vadd.xlane.f32.xlu0 %v238
  %v240 = vpop.xlane.xlu0 %239
  %v241 = vsel %vm147, %v118, 0.0
  %242 = vadd.xlane.f32.xlu0 %v241
  %v243 = vpop.xlane.xlu0 %242
  %v244 = vsel %vm147, %v119, 0.0
  %245 = vadd.xlane.f32.xlu0 %v244
  %v246 = vpop.xlane.xlu0 %245
  %v247 = vsel %vm147, %v120, 0.0
  %248 = vadd.xlane.f32.xlu0 %v247
  %v249 = vpop.xlane.xlu0 %248
  %v250 = vsel %vm147, %v121, 0.0
  %251 = vadd.xlane.f32.xlu0 %v250
  %v252 = vpop.xlane.xlu0 %251
  %v253 = vsel %vm147, %v122, 0.0
  %254 = vadd.xlane.f32.xlu0 %v253
  %v255 = vpop.xlane.xlu0 %254
  %v256 = vsel %vm147, %v123, 0.0
  %257 = vadd.xlane.f32.xlu0 %v256
  %v258 = vpop.xlane.xlu0 %257
  %v259 = vsel %vm147, %v124, 0.0
  %260 = vadd.xlane.f32.xlu0 %v259
  %v261 = vpop.xlane.xlu0 %260
  %v262 = vsel %vm147, %v125, 0.0
  %263 = vadd.xlane.f32.xlu0 %v262
  %v264 = vpop.xlane.xlu0 %263
  %v265 = vsel %vm147, %v126, 0.0
  %266 = vadd.xlane.f32.xlu0 %v265
  %v267 = vpop.xlane.xlu0 %266
  %v268 = vsel %vm147, %v127, 0.0
  %269 = vadd.xlane.f32.xlu0 %v268
  %v270 = vpop.xlane.xlu0 %269
  %v271 = vsel %vm147, %v128, 0.0
  %272 = vadd.xlane.f32.xlu0 %v271
  %v273 = vpop.xlane.xlu0 %272
  %v274 = vsel %vm147, %v129, 0.0
  %275 = vadd.xlane.f32.xlu0 %v274
  %v276 = vpop.xlane.xlu0 %275
  %v277 = vsel %vm147, %v130, 0.0
  %278 = vadd.xlane.f32.xlu0 %v277
  %v279 = vpop.xlane.xlu0 %278
  %v280 = vsel %vm147, %v131, 0.0
  %281 = vadd.xlane.f32.xlu0 %v280
  %v282 = vpop.xlane.xlu0 %281
  %v283 = vsel %vm147, %v132, 0.0
  %284 = vadd.xlane.f32.xlu0 %v283
  %v285 = vpop.xlane.xlu0 %284
  %v286 = vsel %vm147, %v133, 0.0
  %287 = vadd.xlane.f32.xlu0 %v286
  %v288 = vpop.xlane.xlu0 %287
  %v289 = vsel %vm147, %v134, 0.0
  %290 = vadd.xlane.f32.xlu0 %v289
  %v291 = vpop.xlane.xlu0 %290
  %v292 = vsel %vm147, %v135, 0.0
  %293 = vadd.xlane.f32.xlu0 %v292
  %v294 = vpop.xlane.xlu0 %293
  %v295 = vsel %vm147, %v136, 0.0
  %296 = vadd.xlane.f32.xlu0 %v295
  %v297 = vpop.xlane.xlu0 %296
  %v298 = vsel %vm147, %v137, 0.0
  %299 = vadd.xlane.f32.xlu0 %v298
  %v300 = vpop.xlane.xlu0 %299
  %v301 = vsel %vm147, %v138, 0.0
  %302 = vadd.xlane.f32.xlu0 %v301
  %v303 = vpop.xlane.xlu0 %302
  %v304 = vsel %vm147, %v139, 0.0
  %305 = vadd.xlane.f32.xlu0 %v304
  %v306 = vpop.xlane.xlu0 %305
  %v307 = vsel %vm147, %v140, 0.0
  %308 = vadd.xlane.f32.xlu0 %v307
  %v309 = vpop.xlane.xlu0 %308
  %v310 = vsel %vm147, %v141, 0.0
  %311 = vadd.xlane.f32.xlu0 %v310
  %v312 = vpop.xlane.xlu0 %311
  %v313 = vsel %vm147, %v142, 0.0
  %314 = vadd.xlane.f32.xlu0 %v313
  %v315 = vpop.xlane.xlu0 %314
  %v316 = vsel %vm147, %v143, 0.0
  %317 = vadd.xlane.f32.xlu0 %v316
  %v318 = vpop.xlane.xlu0 %317
  %v319 = vsel %vm147, %v144, 0.0
  %320 = vadd.xlane.f32.xlu0 %v319
  %v321 = vpop.xlane.xlu0 %320
  %v322 = vsel %vm147, %v145, 0.0
  %323 = vadd.xlane.f32.xlu0 %v322
  %v324 = vpop.xlane.xlu0 %323
  %v325 = vsel %vm147, %v146, 0.0
  %326 = vadd.xlane.f32.xlu0 %v325
  %v327 = vpop.xlane.xlu0 %326
  %v328 = vld [vmem:[%s2] sm:$0xff]
  %v329 = vld [vmem:[%s2 + $0x8] sm:$0xff]
  %v330 = vld [vmem:[%s2 + $0x10] sm:$0xff]
  %v331 = vld [vmem:[%s2 + $0x18] sm:$0xff]
  %v332 = vld [vmem:[%s2 + $0x20] sm:$0xff]
  %v333 = vld [vmem:[%s2 + $0x28] sm:$0xff]
  %v334 = vld [vmem:[%s2 + $0x30] sm:$0xff]
  %v335 = vld [vmem:[%s2 + $0x38] sm:$0xff]
  %v336 = vld [vmem:[%s2 + $0x40] sm:$0xff]
  %v337 = vld [vmem:[%s2 + $0x48] sm:$0xff]
  %v338 = vld [vmem:[%s2 + $0x50] sm:$0xff]
  %v339 = vld [vmem:[%s2 + $0x58] sm:$0xff]
  %v340 = vld [vmem:[%s2 + $0x60] sm:$0xff]
  %v341 = vld [vmem:[%s2 + $0x68] sm:$0xff]
  %v342 = vld [vmem:[%s2 + $0x70] sm:$0xff]
  %v343 = vld [vmem:[%s2 + $0x78] sm:$0xff]
  %v344 = vld [vmem:[%s2 + $0x80] sm:$0xff]
  %v345 = vld [vmem:[%s2 + $0x88] sm:$0xff]
  %v346 = vld [vmem:[%s2 + $0x90] sm:$0xff]
  %v347 = vld [vmem:[%s2 + $0x98] sm:$0xff]
  %v348 = vld [vmem:[%s2 + $0xa0] sm:$0xff]
  %v349 = vld [vmem:[%s2 + $0xa8] sm:$0xff]
  %v350 = vld [vmem:[%s2 + $0xb0] sm:$0xff]
  %v351 = vld [vmem:[%s2 + $0xb8] sm:$0xff]
  %v352 = vld [vmem:[%s2 + $0xc0] sm:$0xff]
  %v353 = vld [vmem:[%s2 + $0xc8] sm:$0xff]
  %v354 = vld [vmem:[%s2 + $0xd0] sm:$0xff]
  %v355 = vld [vmem:[%s2 + $0xd8] sm:$0xff]
  %v356 = vld [vmem:[%s2 + $0xe0] sm:$0xff]
  %v357 = vld [vmem:[%s2 + $0xe8] sm:$0xff]
  %v358 = vld [vmem:[%s2 + $0xf0] sm:$0xff]
  %v359 = vld [vmem:[%s2 + $0xf8] sm:$0xff]
  %v360 = vld [vmem:[%s2 + $0x100] sm:$0xff]
  %v361 = vld [vmem:[%s2 + $0x108] sm:$0xff]
  %v362 = vld [vmem:[%s2 + $0x110] sm:$0xff]
  %v363 = vld [vmem:[%s2 + $0x118] sm:$0xff]
  %v364 = vld [vmem:[%s2 + $0x120] sm:$0xff]
  %v365 = vld [vmem:[%s2 + $0x128] sm:$0xff]
  %v366 = vld [vmem:[%s2 + $0x130] sm:$0xff]
  %v367 = vld [vmem:[%s2 + $0x138] sm:$0xff]
  %v368 = vld [vmem:[%s2 + $0x140] sm:$0xff]
  %v369 = vld [vmem:[%s2 + $0x148] sm:$0xff]
  %v370 = vld [vmem:[%s2 + $0x150] sm:$0xff]
  %v371 = vld [vmem:[%s2 + $0x158] sm:$0xff]
  %v372 = vld [vmem:[%s2 + $0x160] sm:$0xff]
  %v373 = vld [vmem:[%s2 + $0x168] sm:$0xff]
  %v374 = vld [vmem:[%s2 + $0x170] sm:$0xff]
  %v375 = vld [vmem:[%s2 + $0x178] sm:$0xff]
  %v376 = vld [vmem:[%s2 + $0x180] sm:$0xff]
  %v377 = vld [vmem:[%s2 + $0x188] sm:$0xff]
  %v378 = vld [vmem:[%s2 + $0x190] sm:$0xff]
  %v379 = vld [vmem:[%s2 + $0x198] sm:$0xff]
  %v380 = vld [vmem:[%s2 + $0x1a0] sm:$0xff]
  %v381 = vld [vmem:[%s2 + $0x1a8] sm:$0xff]
  %v382 = vld [vmem:[%s2 + $0x1b0] sm:$0xff]
  %v383 = vld [vmem:[%s2 + $0x1b8] sm:$0xff]
  %v384 = vld [vmem:[%s2 + $0x1c0] sm:$0xff]
  %v385 = vld [vmem:[%s2 + $0x1c8] sm:$0xff]
  %v386 = vld [vmem:[%s2 + $0x1d0] sm:$0xff]
  %v387 = vld [vmem:[%s2 + $0x1d8] sm:$0xff]
  %v388 = vadd.f32 %v150, %v328
  %v389 = vadd.f32 %v153, %v329
  %v390 = vadd.f32 %v156, %v330
  %v391 = vadd.f32 %v159, %v331
  %v392 = vadd.f32 %v162, %v332
  %v393 = vadd.f32 %v165, %v333
  %v394 = vadd.f32 %v168, %v334
  %v395 = vadd.f32 %v171, %v335
  %v396 = vadd.f32 %v174, %v336
  %v397 = vadd.f32 %v177, %v337
  %v398 = vadd.f32 %v180, %v338
  %v399 = vadd.f32 %v183, %v339
  %v400 = vadd.f32 %v186, %v340
  %v401 = vadd.f32 %v189, %v341
  %v402 = vadd.f32 %v192, %v342
  %v403 = vadd.f32 %v195, %v343
  %v404 = vadd.f32 %v198, %v344
  %v405 = vadd.f32 %v201, %v345
  %v406 = vadd.f32 %v204, %v346
  %v407 = vadd.f32 %v207, %v347
  %v408 = vadd.f32 %v210, %v348
  %v409 = vadd.f32 %v213, %v349
  %v410 = vadd.f32 %v216, %v350
  %v411 = vadd.f32 %v219, %v351
  %v412 = vadd.f32 %v222, %v352
  %v413 = vadd.f32 %v225, %v353
  %v414 = vadd.f32 %v228, %v354
  %v415 = vadd.f32 %v231, %v355
  %v416 = vadd.f32 %v234, %v356
  %v417 = vadd.f32 %v237, %v357
  %v418 = vadd.f32 %v240, %v358
  %v419 = vadd.f32 %v243, %v359
  %v420 = vadd.f32 %v246, %v360
  %v421 = vadd.f32 %v249, %v361
  %v422 = vadd.f32 %v252, %v362
  %v423 = vadd.f32 %v255, %v363
  %v424 = vadd.f32 %v258, %v364
  %v425 = vadd.f32 %v261, %v365
  %v426 = vadd.f32 %v264, %v366
  %v427 = vadd.f32 %v267, %v367
  %v428 = vadd.f32 %v270, %v368
  %v429 = vadd.f32 %v273, %v369
  %v430 = vadd.f32 %v276, %v370
  %v431 = vadd.f32 %v279, %v371
  %v432 = vadd.f32 %v282, %v372
  %v433 = vadd.f32 %v285, %v373
  %v434 = vadd.f32 %v288, %v374
  %v435 = vadd.f32 %v291, %v375
  %v436 = vadd.f32 %v294, %v376
  %v437 = vadd.f32 %v297, %v377
  %v438 = vadd.f32 %v300, %v378
  %v439 = vadd.f32 %v303, %v379
  %v440 = vadd.f32 %v306, %v380
  %v441 = vadd.f32 %v309, %v381
  %v442 = vadd.f32 %v312, %v382
  %v443 = vadd.f32 %v315, %v383
  %v444 = vadd.f32 %v318, %v384
  %v445 = vadd.f32 %v321, %v385
  %v446 = vadd.f32 %v324, %v386
  %v447 = vadd.f32 %v327, %v387
  %v448 = vxor.u32 %v388, 2147483648
  %v449 = vxor.u32 %v389, 2147483648
  %v450 = vxor.u32 %v390, 2147483648
  %v451 = vxor.u32 %v391, 2147483648
  %v452 = vxor.u32 %v392, 2147483648
  %v453 = vxor.u32 %v393, 2147483648
  %v454 = vxor.u32 %v394, 2147483648
  %v455 = vxor.u32 %v395, 2147483648
  %v456 = vxor.u32 %v396, 2147483648
  %v457 = vxor.u32 %v397, 2147483648
  %v458 = vxor.u32 %v398, 2147483648
  %v459 = vxor.u32 %v399, 2147483648
  %v460 = vxor.u32 %v400, 2147483648
  %v461 = vxor.u32 %v401, 2147483648
  %v462 = vxor.u32 %v402, 2147483648
  %v463 = vxor.u32 %v403, 2147483648
  %v464 = vxor.u32 %v404, 2147483648
  %v465 = vxor.u32 %v405, 2147483648
  %v466 = vxor.u32 %v406, 2147483648
  %v467 = vxor.u32 %v407, 2147483648
  %v468 = vxor.u32 %v408, 2147483648
  %v469 = vxor.u32 %v409, 2147483648
  %v470 = vxor.u32 %v410, 2147483648
  %v471 = vxor.u32 %v411, 2147483648
  %v472 = vxor.u32 %v412, 2147483648
  %v473 = vxor.u32 %v413, 2147483648
  %v474 = vxor.u32 %v414, 2147483648
  %v475 = vxor.u32 %v415, 2147483648
  %v476 = vxor.u32 %v416, 2147483648
  %v477 = vxor.u32 %v417, 2147483648
  %v478 = vxor.u32 %v418, 2147483648
  %v479 = vxor.u32 %v419, 2147483648
  %v480 = vxor.u32 %v420, 2147483648
  %v481 = vxor.u32 %v421, 2147483648
  %v482 = vxor.u32 %v422, 2147483648
  %v483 = vxor.u32 %v423, 2147483648
  %v484 = vxor.u32 %v424, 2147483648
  %v485 = vxor.u32 %v425, 2147483648
  %v486 = vxor.u32 %v426, 2147483648
  %v487 = vxor.u32 %v427, 2147483648
  %v488 = vxor.u32 %v428, 2147483648
  %v489 = vxor.u32 %v429, 2147483648
  %v490 = vxor.u32 %v430, 2147483648
  %v491 = vxor.u32 %v431, 2147483648
  %v492 = vxor.u32 %v432, 2147483648
  %v493 = vxor.u32 %v433, 2147483648
  %v494 = vxor.u32 %v434, 2147483648
  %v495 = vxor.u32 %v435, 2147483648
  %v496 = vxor.u32 %v436, 2147483648
  %v497 = vxor.u32 %v437, 2147483648
  %v498 = vxor.u32 %v438, 2147483648
  %v499 = vxor.u32 %v439, 2147483648
  %v500 = vxor.u32 %v440, 2147483648
  %v501 = vxor.u32 %v441, 2147483648
  %v502 = vxor.u32 %v442, 2147483648
  %v503 = vxor.u32 %v443, 2147483648
  %v504 = vxor.u32 %v444, 2147483648
  %v505 = vxor.u32 %v445, 2147483648
  %v506 = vxor.u32 %v446, 2147483648
  %v507 = vxor.u32 %v447, 2147483648
  %v508 = vmul.f32 %v448, 1.442695
  %v509 = vpow.pop %v508
  %v510 = vmul.f32 %v449, 1.442695
  %v511 = vpow.pop %v510
  %v512 = vmul.f32 %v450, 1.442695
  %v513 = vpow.pop %v512
  %v514 = vmul.f32 %v451, 1.442695
  %v515 = vpow.pop %v514
  %v516 = vmul.f32 %v452, 1.442695
  %v517 = vpow.pop %v516
  %v518 = vmul.f32 %v453, 1.442695
  %v519 = vpow.pop %v518
  %v520 = vmul.f32 %v454, 1.442695
  %v521 = vpow.pop %v520
  %v522 = vmul.f32 %v455, 1.442695
  %v523 = vpow.pop %v522
  %v524 = vmul.f32 %v456, 1.442695
  %v525 = vpow.pop %v524
  %v526 = vmul.f32 %v457, 1.442695
  %v527 = vpow.pop %v526
  %v528 = vmul.f32 %v458, 1.442695
  %v529 = vpow.pop %v528
  %v530 = vmul.f32 %v459, 1.442695
  %v531 = vpow.pop %v530
  %v532 = vmul.f32 %v460, 1.442695
  %v533 = vpow.pop %v532
  %v534 = vmul.f32 %v461, 1.442695
  %v535 = vpow.pop %v534
  %v536 = vmul.f32 %v462, 1.442695
  %v537 = vpow.pop %v536
  %v538 = vmul.f32 %v463, 1.442695
  %v539 = vpow.pop %v538
  %v540 = vmul.f32 %v464, 1.442695
  %v541 = vpow.pop %v540
  %v542 = vmul.f32 %v465, 1.442695
  %v543 = vpow.pop %v542
  %v544 = vmul.f32 %v466, 1.442695
  %v545 = vpow.pop %v544
  %v546 = vmul.f32 %v467, 1.442695
  %v547 = vpow.pop %v546
  %v548 = vmul.f32 %v468, 1.442695
  %v549 = vpow.pop %v548
  %v550 = vmul.f32 %v469, 1.442695
  %v551 = vpow.pop %v550
  %v552 = vmul.f32 %v470, 1.442695
  %v553 = vpow.pop %v552
  %v554 = vmul.f32 %v471, 1.442695
  %v555 = vpow.pop %v554
  %v556 = vmul.f32 %v472, 1.442695
  %v557 = vpow.pop %v556
  %v558 = vmul.f32 %v473, 1.442695
  %v559 = vpow.pop %v558
  %v560 = vmul.f32 %v474, 1.442695
  %v561 = vpow.pop %v560
  %v562 = vmul.f32 %v475, 1.442695
  %v563 = vpow.pop %v562
  %v564 = vmul.f32 %v476, 1.442695
  %v565 = vpow.pop %v564
  %v566 = vmul.f32 %v477, 1.442695
  %v567 = vpow.pop %v566
  %v568 = vmul.f32 %v478, 1.442695
  %v569 = vpow.pop %v568
  %v570 = vmul.f32 %v479, 1.442695
  %v571 = vpow.pop %v570
  %v572 = vmul.f32 %v480, 1.442695
  %v573 = vpow.pop %v572
  %v574 = vmul.f32 %v481, 1.442695
  %v575 = vpow.pop %v574
  %v576 = vmul.f32 %v482, 1.442695
  %v577 = vpow.pop %v576
  %v578 = vmul.f32 %v483, 1.442695
  %v579 = vpow.pop %v578
  %v580 = vmul.f32 %v484, 1.442695
  %v581 = vpow.pop %v580
  %v582 = vmul.f32 %v485, 1.442695
  %v583 = vpow.pop %v582
  %v584 = vmul.f32 %v486, 1.442695
  %v585 = vpow.pop %v584
  %v586 = vmul.f32 %v487, 1.442695
  %v587 = vpow.pop %v586
  %v588 = vmul.f32 %v488, 1.442695
  %v589 = vpow.pop %v588
  %v590 = vmul.f32 %v489, 1.442695
  %v591 = vpow.pop %v590
  %v592 = vmul.f32 %v490, 1.442695
  %v593 = vpow.pop %v592
  %v594 = vmul.f32 %v491, 1.442695
  %v595 = vpow.pop %v594
  %v596 = vmul.f32 %v492, 1.442695
  %v597 = vpow.pop %v596
  %v598 = vmul.f32 %v493, 1.442695
  %v599 = vpow.pop %v598
  %v600 = vmul.f32 %v494, 1.442695
  %v601 = vpow.pop %v600
  %v602 = vmul.f32 %v495, 1.442695
  %v603 = vpow.pop %v602
  %v604 = vmul.f32 %v496, 1.442695
  %v605 = vpow.pop %v604
  %v606 = vmul.f32 %v497, 1.442695
  %v607 = vpow.pop %v606
  %v608 = vmul.f32 %v498, 1.442695
  %v609 = vpow.pop %v608
  %v610 = vmul.f32 %v499, 1.442695
  %v611 = vpow.pop %v610
  %v612 = vmul.f32 %v500, 1.442695
  %v613 = vpow.pop %v612
  %v614 = vmul.f32 %v501, 1.442695
  %v615 = vpow.pop %v614
  %v616 = vmul.f32 %v502, 1.442695
  %v617 = vpow.pop %v616
  %v618 = vmul.f32 %v503, 1.442695
  %v619 = vpow.pop %v618
  %v620 = vmul.f32 %v504, 1.442695
  %v621 = vpow.pop %v620
  %v622 = vmul.f32 %v505, 1.442695
  %v623 = vpow.pop %v622
  %v624 = vmul.f32 %v506, 1.442695
  %v625 = vpow.pop %v624
  %v626 = vmul.f32 %v507, 1.442695
  %v627 = vpow.pop %v626
  %v628 = vadd.f32 %v509, 1.0
  %v629 = vadd.f32 %v511, 1.0
  %v630 = vadd.f32 %v513, 1.0
  %v631 = vadd.f32 %v515, 1.0
  %v632 = vadd.f32 %v517, 1.0
  %v633 = vadd.f32 %v519, 1.0
  %v634 = vadd.f32 %v521, 1.0
  %v635 = vadd.f32 %v523, 1.0
  %v636 = vadd.f32 %v525, 1.0
  %v637 = vadd.f32 %v527, 1.0
  %v638 = vadd.f32 %v529, 1.0
  %v639 = vadd.f32 %v531, 1.0
  %v640 = vadd.f32 %v533, 1.0
  %v641 = vadd.f32 %v535, 1.0
  %v642 = vadd.f32 %v537, 1.0
  %v643 = vadd.f32 %v539, 1.0
  %v644 = vadd.f32 %v541, 1.0
  %v645 = vadd.f32 %v543, 1.0
  %v646 = vadd.f32 %v545, 1.0
  %v647 = vadd.f32 %v547, 1.0
  %v648 = vadd.f32 %v549, 1.0
  %v649 = vadd.f32 %v551, 1.0
  %v650 = vadd.f32 %v553, 1.0
  %v651 = vadd.f32 %v555, 1.0
  %v652 = vadd.f32 %v557, 1.0
  %v653 = vadd.f32 %v559, 1.0
  %v654 = vadd.f32 %v561, 1.0
  %v655 = vadd.f32 %v563, 1.0
  %v656 = vadd.f32 %v565, 1.0
  %v657 = vadd.f32 %v567, 1.0
  %v658 = vadd.f32 %v569, 1.0
  %v659 = vadd.f32 %v571, 1.0
  %v660 = vadd.f32 %v573, 1.0
  %v661 = vadd.f32 %v575, 1.0
  %v662 = vadd.f32 %v577, 1.0
  %v663 = vadd.f32 %v579, 1.0
  %v664 = vadd.f32 %v581, 1.0
  %v665 = vadd.f32 %v583, 1.0
  %v666 = vadd.f32 %v585, 1.0
  %v667 = vadd.f32 %v587, 1.0
  %v668 = vadd.f32 %v589, 1.0
  %v669 = vadd.f32 %v591, 1.0
  %v670 = vadd.f32 %v593, 1.0
  %v671 = vadd.f32 %v595, 1.0
  %v672 = vadd.f32 %v597, 1.0
  %v673 = vadd.f32 %v599, 1.0
  %v674 = vadd.f32 %v601, 1.0
  %v675 = vadd.f32 %v603, 1.0
  %v676 = vadd.f32 %v605, 1.0
  %v677 = vadd.f32 %v607, 1.0
  %v678 = vadd.f32 %v609, 1.0
  %v679 = vadd.f32 %v611, 1.0
  %v680 = vadd.f32 %v613, 1.0
  %v681 = vadd.f32 %v615, 1.0
  %v682 = vadd.f32 %v617, 1.0
  %v683 = vadd.f32 %v619, 1.0
  %v684 = vadd.f32 %v621, 1.0
  %v685 = vadd.f32 %v623, 1.0
  %v686 = vadd.f32 %v625, 1.0
  %v687 = vadd.f32 %v627, 1.0
  %v688 = vrcp.pop %v628
  %v689 = vmul.f32 1.0, %v688
  %v690 = vrcp.pop %v629
  %v691 = vmul.f32 1.0, %v690
  %v692 = vrcp.pop %v630
  %v693 = vmul.f32 1.0, %v692
  %v694 = vrcp.pop %v631
  %v695 = vmul.f32 1.0, %v694
  %v696 = vrcp.pop %v632
  %v697 = vmul.f32 1.0, %v696
  %v698 = vrcp.pop %v633
  %v699 = vmul.f32 1.0, %v698
  %v700 = vrcp.pop %v634
  %v701 = vmul.f32 1.0, %v700
  %v702 = vrcp.pop %v635
  %v703 = vmul.f32 1.0, %v702
  %v704 = vrcp.pop %v636
  %v705 = vmul.f32 1.0, %v704
  %v706 = vrcp.pop %v637
  %v707 = vmul.f32 1.0, %v706
  %v708 = vrcp.pop %v638
  %v709 = vmul.f32 1.0, %v708
  %v710 = vrcp.pop %v639
  %v711 = vmul.f32 1.0, %v710
  %v712 = vrcp.pop %v640
  %v713 = vmul.f32 1.0, %v712
  %v714 = vrcp.pop %v641
  %v715 = vmul.f32 1.0, %v714
  %v716 = vrcp.pop %v642
  %v717 = vmul.f32 1.0, %v716
  %v718 = vrcp.pop %v643
  %v719 = vmul.f32 1.0, %v718
  %v720 = vrcp.pop %v644
  %v721 = vmul.f32 1.0, %v720
  %v722 = vrcp.pop %v645
  %v723 = vmul.f32 1.0, %v722
  %v724 = vrcp.pop %v646
  %v725 = vmul.f32 1.0, %v724
  %v726 = vrcp.pop %v647
  %v727 = vmul.f32 1.0, %v726
  %v728 = vrcp.pop %v648
  %v729 = vmul.f32 1.0, %v728
  %v730 = vrcp.pop %v649
  %v731 = vmul.f32 1.0, %v730
  %v732 = vrcp.pop %v650
  %v733 = vmul.f32 1.0, %v732
  %v734 = vrcp.pop %v651
  %v735 = vmul.f32 1.0, %v734
  %v736 = vrcp.pop %v652
  %v737 = vmul.f32 1.0, %v736
  %v738 = vrcp.pop %v653
  %v739 = vmul.f32 1.0, %v738
  %v740 = vrcp.pop %v654
  %v741 = vmul.f32 1.0, %v740
  %v742 = vrcp.pop %v655
  %v743 = vmul.f32 1.0, %v742
  %v744 = vrcp.pop %v656
  %v745 = vmul.f32 1.0, %v744
  %v746 = vrcp.pop %v657
  %v747 = vmul.f32 1.0, %v746
  %v748 = vrcp.pop %v658
  %v749 = vmul.f32 1.0, %v748
  %v750 = vrcp.pop %v659
  %v751 = vmul.f32 1.0, %v750
  %v752 = vrcp.pop %v660
  %v753 = vmul.f32 1.0, %v752
  %v754 = vrcp.pop %v661
  %v755 = vmul.f32 1.0, %v754
  %v756 = vrcp.pop %v662
  %v757 = vmul.f32 1.0, %v756
  %v758 = vrcp.pop %v663
  %v759 = vmul.f32 1.0, %v758
  %v760 = vrcp.pop %v664
  %v761 = vmul.f32 1.0, %v760
  %v762 = vrcp.pop %v665
  %v763 = vmul.f32 1.0, %v762
  %v764 = vrcp.pop %v666
  %v765 = vmul.f32 1.0, %v764
  %v766 = vrcp.pop %v667
  %v767 = vmul.f32 1.0, %v766
  %v768 = vrcp.pop %v668
  %v769 = vmul.f32 1.0, %v768
  %v770 = vrcp.pop %v669
  %v771 = vmul.f32 1.0, %v770
  %v772 = vrcp.pop %v670
  %v773 = vmul.f32 1.0, %v772
  %v774 = vrcp.pop %v671
  %v775 = vmul.f32 1.0, %v774
  %v776 = vrcp.pop %v672
  %v777 = vmul.f32 1.0, %v776
  %v778 = vrcp.pop %v673
  %v779 = vmul.f32 1.0, %v778
  %v780 = vrcp.pop %v674
  %v781 = vmul.f32 1.0, %v780
  %v782 = vrcp.pop %v675
  %v783 = vmul.f32 1.0, %v782
  %v784 = vrcp.pop %v676
  %v785 = vmul.f32 1.0, %v784
  %v786 = vrcp.pop %v677
  %v787 = vmul.f32 1.0, %v786
  %v788 = vrcp.pop %v678
  %v789 = vmul.f32 1.0, %v788
  %v790 = vrcp.pop %v679
  %v791 = vmul.f32 1.0, %v790
  %v792 = vrcp.pop %v680
  %v793 = vmul.f32 1.0, %v792
  %v794 = vrcp.pop %v681
  %v795 = vmul.f32 1.0, %v794
  %v796 = vrcp.pop %v682
  %v797 = vmul.f32 1.0, %v796
  %v798 = vrcp.pop %v683
  %v799 = vmul.f32 1.0, %v798
  %v800 = vrcp.pop %v684
  %v801 = vmul.f32 1.0, %v800
  %v802 = vrcp.pop %v685
  %v803 = vmul.f32 1.0, %v802
  %v804 = vrcp.pop %v686
  %v805 = vmul.f32 1.0, %v804
  %v806 = vrcp.pop %v687
  %v807 = vmul.f32 1.0, %v806
  %v808 = vld [vmem:[%s3] sm:$0xff]
  %v809 = vld [vmem:[%s3 + $0x8] sm:$0xff]
  %v810 = vld [vmem:[%s3 + $0x10] sm:$0xff]
  %v811 = vld [vmem:[%s3 + $0x18] sm:$0xff]
  %v812 = vld [vmem:[%s3 + $0x20] sm:$0xff]
  %v813 = vld [vmem:[%s3 + $0x28] sm:$0xff]
  %v814 = vld [vmem:[%s3 + $0x30] sm:$0xff]
  %v815 = vld [vmem:[%s3 + $0x38] sm:$0xff]
  %v816 = vld [vmem:[%s3 + $0x40] sm:$0xff]
  %v817 = vld [vmem:[%s3 + $0x48] sm:$0xff]
  %v818 = vld [vmem:[%s3 + $0x50] sm:$0xff]
  %v819 = vld [vmem:[%s3 + $0x58] sm:$0xff]
  %v820 = vld [vmem:[%s3 + $0x60] sm:$0xff]
  %v821 = vld [vmem:[%s3 + $0x68] sm:$0xff]
  %v822 = vld [vmem:[%s3 + $0x70] sm:$0xff]
  %v823 = vld [vmem:[%s3 + $0x78] sm:$0xff]
  %v824 = vld [vmem:[%s3 + $0x80] sm:$0xff]
  %v825 = vld [vmem:[%s3 + $0x88] sm:$0xff]
  %v826 = vld [vmem:[%s3 + $0x90] sm:$0xff]
  %v827 = vld [vmem:[%s3 + $0x98] sm:$0xff]
  %v828 = vld [vmem:[%s3 + $0xa0] sm:$0xff]
  %v829 = vld [vmem:[%s3 + $0xa8] sm:$0xff]
  %v830 = vld [vmem:[%s3 + $0xb0] sm:$0xff]
  %v831 = vld [vmem:[%s3 + $0xb8] sm:$0xff]
  %v832 = vld [vmem:[%s3 + $0xc0] sm:$0xff]
  %v833 = vld [vmem:[%s3 + $0xc8] sm:$0xff]
  %v834 = vld [vmem:[%s3 + $0xd0] sm:$0xff]
  %v835 = vld [vmem:[%s3 + $0xd8] sm:$0xff]
  %v836 = vld [vmem:[%s3 + $0xe0] sm:$0xff]
  %v837 = vld [vmem:[%s3 + $0xe8] sm:$0xff]
  %v838 = vld [vmem:[%s3 + $0xf0] sm:$0xff]
  %v839 = vld [vmem:[%s3 + $0xf8] sm:$0xff]
  %v840 = vld [vmem:[%s3 + $0x100] sm:$0xff]
  %v841 = vld [vmem:[%s3 + $0x108] sm:$0xff]
  %v842 = vld [vmem:[%s3 + $0x110] sm:$0xff]
  %v843 = vld [vmem:[%s3 + $0x118] sm:$0xff]
  %v844 = vld [vmem:[%s3 + $0x120] sm:$0xff]
  %v845 = vld [vmem:[%s3 + $0x128] sm:$0xff]
  %v846 = vld [vmem:[%s3 + $0x130] sm:$0xff]
  %v847 = vld [vmem:[%s3 + $0x138] sm:$0xff]
  %v848 = vld [vmem:[%s3 + $0x140] sm:$0xff]
  %v849 = vld [vmem:[%s3 + $0x148] sm:$0xff]
  %v850 = vld [vmem:[%s3 + $0x150] sm:$0xff]
  %v851 = vld [vmem:[%s3 + $0x158] sm:$0xff]
  %v852 = vld [vmem:[%s3 + $0x160] sm:$0xff]
  %v853 = vld [vmem:[%s3 + $0x168] sm:$0xff]
  %v854 = vld [vmem:[%s3 + $0x170] sm:$0xff]
  %v855 = vld [vmem:[%s3 + $0x178] sm:$0xff]
  %v856 = vld [vmem:[%s3 + $0x180] sm:$0xff]
  %v857 = vld [vmem:[%s3 + $0x188] sm:$0xff]
  %v858 = vld [vmem:[%s3 + $0x190] sm:$0xff]
  %v859 = vld [vmem:[%s3 + $0x198] sm:$0xff]
  %v860 = vld [vmem:[%s3 + $0x1a0] sm:$0xff]
  %v861 = vld [vmem:[%s3 + $0x1a8] sm:$0xff]
  %v862 = vld [vmem:[%s3 + $0x1b0] sm:$0xff]
  %v863 = vld [vmem:[%s3 + $0x1b8] sm:$0xff]
  %v864 = vld [vmem:[%s3 + $0x1c0] sm:$0xff]
  %v865 = vld [vmem:[%s3 + $0x1c8] sm:$0xff]
  %v866 = vld [vmem:[%s3 + $0x1d0] sm:$0xff]
  %v867 = vld [vmem:[%s3 + $0x1d8] sm:$0xff]
  %v868 = vld [vmem:[%s3 + $0x1e0] sm:$0xff]
  %v869 = vld [vmem:[%s3 + $0x1e8] sm:$0xff]
  %v870 = vld [vmem:[%s3 + $0x1f0] sm:$0xff]
  %v871 = vld [vmem:[%s3 + $0x1f8] sm:$0xff]
  %v872 = vld [vmem:[%s3 + $0x200] sm:$0xff]
  %v873 = vld [vmem:[%s3 + $0x208] sm:$0xff]
  %v874 = vld [vmem:[%s3 + $0x210] sm:$0xff]
  %v875 = vld [vmem:[%s3 + $0x218] sm:$0xff]
  %v876 = vld [vmem:[%s3 + $0x220] sm:$0xff]
  %v877 = vld [vmem:[%s3 + $0x228] sm:$0xff]
  %v878 = vld [vmem:[%s3 + $0x230] sm:$0xff]
  %v879 = vld [vmem:[%s3 + $0x238] sm:$0xff]
  %v880 = vld [vmem:[%s3 + $0x240] sm:$0xff]
  %v881 = vld [vmem:[%s3 + $0x248] sm:$0xff]
  %v882 = vld [vmem:[%s3 + $0x250] sm:$0xff]
  %v883 = vld [vmem:[%s3 + $0x258] sm:$0xff]
  %v884 = vld [vmem:[%s3 + $0x260] sm:$0xff]
  %v885 = vld [vmem:[%s3 + $0x268] sm:$0xff]
  %v886 = vld [vmem:[%s3 + $0x270] sm:$0xff]
  %v887 = vld [vmem:[%s3 + $0x278] sm:$0xff]
  %v888 = vld [vmem:[%s3 + $0x280] sm:$0xff]
  %v889 = vld [vmem:[%s3 + $0x288] sm:$0xff]
  %v890 = vld [vmem:[%s3 + $0x290] sm:$0xff]
  %v891 = vld [vmem:[%s3 + $0x298] sm:$0xff]
  %v892 = vld [vmem:[%s3 + $0x2a0] sm:$0xff]
  %v893 = vld [vmem:[%s3 + $0x2a8] sm:$0xff]
  %v894 = vld [vmem:[%s3 + $0x2b0] sm:$0xff]
  %v895 = vld [vmem:[%s3 + $0x2b8] sm:$0xff]
  %v896 = vld [vmem:[%s3 + $0x2c0] sm:$0xff]
  %v897 = vld [vmem:[%s3 + $0x2c8] sm:$0xff]
  %v898 = vld [vmem:[%s3 + $0x2d0] sm:$0xff]
  %v899 = vld [vmem:[%s3 + $0x2d8] sm:$0xff]
  %v900 = vld [vmem:[%s3 + $0x2e0] sm:$0xff]
  %v901 = vld [vmem:[%s3 + $0x2e8] sm:$0xff]
  %v902 = vld [vmem:[%s3 + $0x2f0] sm:$0xff]
  %v903 = vld [vmem:[%s3 + $0x2f8] sm:$0xff]
  %v904 = vld [vmem:[%s3 + $0x300] sm:$0xff]
  %v905 = vld [vmem:[%s3 + $0x308] sm:$0xff]
  %v906 = vld [vmem:[%s3 + $0x310] sm:$0xff]
  %v907 = vld [vmem:[%s3 + $0x318] sm:$0xff]
  %v908 = vld [vmem:[%s3 + $0x320] sm:$0xff]
  %v909 = vld [vmem:[%s3 + $0x328] sm:$0xff]
  %v910 = vld [vmem:[%s3 + $0x330] sm:$0xff]
  %v911 = vld [vmem:[%s3 + $0x338] sm:$0xff]
  %v912 = vld [vmem:[%s3 + $0x340] sm:$0xff]
  %v913 = vld [vmem:[%s3 + $0x348] sm:$0xff]
  %v914 = vld [vmem:[%s3 + $0x350] sm:$0xff]
  %v915 = vld [vmem:[%s3 + $0x358] sm:$0xff]
  %v916 = vld [vmem:[%s3 + $0x360] sm:$0xff]
  %v917 = vld [vmem:[%s3 + $0x368] sm:$0xff]
  %v918 = vld [vmem:[%s3 + $0x370] sm:$0xff]
  %v919 = vld [vmem:[%s3 + $0x378] sm:$0xff]
  %v920 = vld [vmem:[%s3 + $0x380] sm:$0xff]
  %v921 = vld [vmem:[%s3 + $0x388] sm:$0xff]
  %v922 = vld [vmem:[%s3 + $0x390] sm:$0xff]
  %v923 = vld [vmem:[%s3 + $0x398] sm:$0xff]
  %v924 = vld [vmem:[%s3 + $0x3a0] sm:$0xff]
  %v925 = vld [vmem:[%s3 + $0x3a8] sm:$0xff]
  %v926 = vld [vmem:[%s3 + $0x3b0] sm:$0xff]
  %v927 = vld [vmem:[%s3 + $0x3b8] sm:$0xff]
  %929 = vset.pattern.permute.xlu0 0
  %930 = vperm.xlu0 %929, %v689
  %v931 = vpop.permute.xlu0 %930
  %934 = vset.pattern.permute.xlu0 0
  %935 = vperm.xlu0 %934, %v691
  %v936 = vpop.permute.xlu0 %935
  %939 = vset.pattern.permute.xlu0 0
  %940 = vperm.xlu0 %939, %v693
  %v941 = vpop.permute.xlu0 %940
  %944 = vset.pattern.permute.xlu0 0
  %945 = vperm.xlu0 %944, %v695
  %v946 = vpop.permute.xlu0 %945
  %949 = vset.pattern.permute.xlu0 0
  %950 = vperm.xlu0 %949, %v697
  %v951 = vpop.permute.xlu0 %950
  %954 = vset.pattern.permute.xlu0 0
  %955 = vperm.xlu0 %954, %v699
  %v956 = vpop.permute.xlu0 %955
  %959 = vset.pattern.permute.xlu0 0
  %960 = vperm.xlu0 %959, %v701
  %v961 = vpop.permute.xlu0 %960
  %964 = vset.pattern.permute.xlu0 0
  %965 = vperm.xlu0 %964, %v703
  %v966 = vpop.permute.xlu0 %965
  %969 = vset.pattern.permute.xlu0 0
  %970 = vperm.xlu0 %969, %v705
  %v971 = vpop.permute.xlu0 %970
  %974 = vset.pattern.permute.xlu0 0
  %975 = vperm.xlu0 %974, %v707
  %v976 = vpop.permute.xlu0 %975
  %979 = vset.pattern.permute.xlu0 0
  %980 = vperm.xlu0 %979, %v709
  %v981 = vpop.permute.xlu0 %980
  %984 = vset.pattern.permute.xlu0 0
  %985 = vperm.xlu0 %984, %v711
  %v986 = vpop.permute.xlu0 %985
  %989 = vset.pattern.permute.xlu0 0
  %990 = vperm.xlu0 %989, %v713
  %v991 = vpop.permute.xlu0 %990
  %994 = vset.pattern.permute.xlu0 0
  %995 = vperm.xlu0 %994, %v715
  %v996 = vpop.permute.xlu0 %995
  %999 = vset.pattern.permute.xlu0 0
  %1000 = vperm.xlu0 %999, %v717
  %v1001 = vpop.permute.xlu0 %1000
  %1004 = vset.pattern.permute.xlu0 0
  %1005 = vperm.xlu0 %1004, %v719
  %v1006 = vpop.permute.xlu0 %1005
  %1009 = vset.pattern.permute.xlu0 0
  %1010 = vperm.xlu0 %1009, %v721
  %v1011 = vpop.permute.xlu0 %1010
  %1014 = vset.pattern.permute.xlu0 0
  %1015 = vperm.xlu0 %1014, %v723
  %v1016 = vpop.permute.xlu0 %1015
  %1019 = vset.pattern.permute.xlu0 0
  %1020 = vperm.xlu0 %1019, %v725
  %v1021 = vpop.permute.xlu0 %1020
  %1024 = vset.pattern.permute.xlu0 0
  %1025 = vperm.xlu0 %1024, %v727
  %v1026 = vpop.permute.xlu0 %1025
  %1029 = vset.pattern.permute.xlu0 0
  %1030 = vperm.xlu0 %1029, %v729
  %v1031 = vpop.permute.xlu0 %1030
  %1034 = vset.pattern.permute.xlu0 0
  %1035 = vperm.xlu0 %1034, %v731
  %v1036 = vpop.permute.xlu0 %1035
  %1039 = vset.pattern.permute.xlu0 0
  %1040 = vperm.xlu0 %1039, %v733
  %v1041 = vpop.permute.xlu0 %1040
  %1044 = vset.pattern.permute.xlu0 0
  %1045 = vperm.xlu0 %1044, %v735
  %v1046 = vpop.permute.xlu0 %1045
  %1049 = vset.pattern.permute.xlu0 0
  %1050 = vperm.xlu0 %1049, %v737
  %v1051 = vpop.permute.xlu0 %1050
  %1054 = vset.pattern.permute.xlu0 0
  %1055 = vperm.xlu0 %1054, %v739
  %v1056 = vpop.permute.xlu0 %1055
  %1059 = vset.pattern.permute.xlu0 0
  %1060 = vperm.xlu0 %1059, %v741
  %v1061 = vpop.permute.xlu0 %1060
  %1064 = vset.pattern.permute.xlu0 0
  %1065 = vperm.xlu0 %1064, %v743
  %v1066 = vpop.permute.xlu0 %1065
  %1069 = vset.pattern.permute.xlu0 0
  %1070 = vperm.xlu0 %1069, %v745
  %v1071 = vpop.permute.xlu0 %1070
  %1074 = vset.pattern.permute.xlu0 0
  %1075 = vperm.xlu0 %1074, %v747
  %v1076 = vpop.permute.xlu0 %1075
  %1079 = vset.pattern.permute.xlu0 0
  %1080 = vperm.xlu0 %1079, %v749
  %v1081 = vpop.permute.xlu0 %1080
  %1084 = vset.pattern.permute.xlu0 0
  %1085 = vperm.xlu0 %1084, %v751
  %v1086 = vpop.permute.xlu0 %1085
  %1089 = vset.pattern.permute.xlu0 0
  %1090 = vperm.xlu0 %1089, %v753
  %v1091 = vpop.permute.xlu0 %1090
  %1094 = vset.pattern.permute.xlu0 0
  %1095 = vperm.xlu0 %1094, %v755
  %v1096 = vpop.permute.xlu0 %1095
  %1099 = vset.pattern.permute.xlu0 0
  %1100 = vperm.xlu0 %1099, %v757
  %v1101 = vpop.permute.xlu0 %1100
  %1104 = vset.pattern.permute.xlu0 0
  %1105 = vperm.xlu0 %1104, %v759
  %v1106 = vpop.permute.xlu0 %1105
  %1109 = vset.pattern.permute.xlu0 0
  %1110 = vperm.xlu0 %1109, %v761
  %v1111 = vpop.permute.xlu0 %1110
  %1114 = vset.pattern.permute.xlu0 0
  %1115 = vperm.xlu0 %1114, %v763
  %v1116 = vpop.permute.xlu0 %1115
  %1119 = vset.pattern.permute.xlu0 0
  %1120 = vperm.xlu0 %1119, %v765
  %v1121 = vpop.permute.xlu0 %1120
  %1124 = vset.pattern.permute.xlu0 0
  %1125 = vperm.xlu0 %1124, %v767
  %v1126 = vpop.permute.xlu0 %1125
  %1129 = vset.pattern.permute.xlu0 0
  %1130 = vperm.xlu0 %1129, %v769
  %v1131 = vpop.permute.xlu0 %1130
  %1134 = vset.pattern.permute.xlu0 0
  %1135 = vperm.xlu0 %1134, %v771
  %v1136 = vpop.permute.xlu0 %1135
  %1139 = vset.pattern.permute.xlu0 0
  %1140 = vperm.xlu0 %1139, %v773
  %v1141 = vpop.permute.xlu0 %1140
  %1144 = vset.pattern.permute.xlu0 0
  %1145 = vperm.xlu0 %1144, %v775
  %v1146 = vpop.permute.xlu0 %1145
  %1149 = vset.pattern.permute.xlu0 0
  %1150 = vperm.xlu0 %1149, %v777
  %v1151 = vpop.permute.xlu0 %1150
  %1154 = vset.pattern.permute.xlu0 0
  %1155 = vperm.xlu0 %1154, %v779
  %v1156 = vpop.permute.xlu0 %1155
  %1159 = vset.pattern.permute.xlu0 0
  %1160 = vperm.xlu0 %1159, %v781
  %v1161 = vpop.permute.xlu0 %1160
  %1164 = vset.pattern.permute.xlu0 0
  %1165 = vperm.xlu0 %1164, %v783
  %v1166 = vpop.permute.xlu0 %1165
  %1169 = vset.pattern.permute.xlu0 0
  %1170 = vperm.xlu0 %1169, %v785
  %v1171 = vpop.permute.xlu0 %1170
  %1174 = vset.pattern.permute.xlu0 0
  %1175 = vperm.xlu0 %1174, %v787
  %v1176 = vpop.permute.xlu0 %1175
  %1179 = vset.pattern.permute.xlu0 0
  %1180 = vperm.xlu0 %1179, %v789
  %v1181 = vpop.permute.xlu0 %1180
  %1184 = vset.pattern.permute.xlu0 0
  %1185 = vperm.xlu0 %1184, %v791
  %v1186 = vpop.permute.xlu0 %1185
  %1189 = vset.pattern.permute.xlu0 0
  %1190 = vperm.xlu0 %1189, %v793
  %v1191 = vpop.permute.xlu0 %1190
  %1194 = vset.pattern.permute.xlu0 0
  %1195 = vperm.xlu0 %1194, %v795
  %v1196 = vpop.permute.xlu0 %1195
  %1199 = vset.pattern.permute.xlu0 0
  %1200 = vperm.xlu0 %1199, %v797
  %v1201 = vpop.permute.xlu0 %1200
  %1204 = vset.pattern.permute.xlu0 0
  %1205 = vperm.xlu0 %1204, %v799
  %v1206 = vpop.permute.xlu0 %1205
  %1209 = vset.pattern.permute.xlu0 0
  %1210 = vperm.xlu0 %1209, %v801
  %v1211 = vpop.permute.xlu0 %1210
  %1214 = vset.pattern.permute.xlu0 0
  %1215 = vperm.xlu0 %1214, %v803
  %v1216 = vpop.permute.xlu0 %1215
  %1219 = vset.pattern.permute.xlu0 0
  %1220 = vperm.xlu0 %1219, %v805
  %v1221 = vpop.permute.xlu0 %1220
  %1224 = vset.pattern.permute.xlu0 0
  %1225 = vperm.xlu0 %1224, %v807
  %v1226 = vpop.permute.xlu0 %1225
  %v1228 = vmul.f32 %v808, %v931
  %v1229 = vmul.f32 %v809, %v931
  %v1230 = vmul.f32 %v810, %v936
  %v1231 = vmul.f32 %v811, %v936
  %v1232 = vmul.f32 %v812, %v941
  %v1233 = vmul.f32 %v813, %v941
  %v1234 = vmul.f32 %v814, %v946
  %v1235 = vmul.f32 %v815, %v946
  %v1236 = vmul.f32 %v816, %v951
  %v1237 = vmul.f32 %v817, %v951
  %v1238 = vmul.f32 %v818, %v956
  %v1239 = vmul.f32 %v819, %v956
  %v1240 = vmul.f32 %v820, %v961
  %v1241 = vmul.f32 %v821, %v961
  %v1242 = vmul.f32 %v822, %v966
  %v1243 = vmul.f32 %v823, %v966
  %v1244 = vmul.f32 %v824, %v971
  %v1245 = vmul.f32 %v825, %v971
  %v1246 = vmul.f32 %v826, %v976
  %v1247 = vmul.f32 %v827, %v976
  %v1248 = vmul.f32 %v828, %v981
  %v1249 = vmul.f32 %v829, %v981
  %v1250 = vmul.f32 %v830, %v986
  %v1251 = vmul.f32 %v831, %v986
  %v1252 = vmul.f32 %v832, %v991
  %v1253 = vmul.f32 %v833, %v991
  %v1254 = vmul.f32 %v834, %v996
  %v1255 = vmul.f32 %v835, %v996
  %v1256 = vmul.f32 %v836, %v1001
  %v1257 = vmul.f32 %v837, %v1001
  %v1258 = vmul.f32 %v838, %v1006
  %v1259 = vmul.f32 %v839, %v1006
  %v1260 = vmul.f32 %v840, %v1011
  %v1261 = vmul.f32 %v841, %v1011
  %v1262 = vmul.f32 %v842, %v1016
  %v1263 = vmul.f32 %v843, %v1016
  %v1264 = vmul.f32 %v844, %v1021
  %v1265 = vmul.f32 %v845, %v1021
  %v1266 = vmul.f32 %v846, %v1026
  %v1267 = vmul.f32 %v847, %v1026
  %v1268 = vmul.f32 %v848, %v1031
  %v1269 = vmul.f32 %v849, %v1031
  %v1270 = vmul.f32 %v850, %v1036
  %v1271 = vmul.f32 %v851, %v1036
  %v1272 = vmul.f32 %v852, %v1041
  %v1273 = vmul.f32 %v853, %v1041
  %v1274 = vmul.f32 %v854, %v1046
  %v1275 = vmul.f32 %v855, %v1046
  %v1276 = vmul.f32 %v856, %v1051
  %v1277 = vmul.f32 %v857, %v1051
  %v1278 = vmul.f32 %v858, %v1056
  %v1279 = vmul.f32 %v859, %v1056
  %v1280 = vmul.f32 %v860, %v1061
  %v1281 = vmul.f32 %v861, %v1061
  %v1282 = vmul.f32 %v862, %v1066
  %v1283 = vmul.f32 %v863, %v1066
  %v1284 = vmul.f32 %v864, %v1071
  %v1285 = vmul.f32 %v865, %v1071
  %v1286 = vmul.f32 %v866, %v1076
  %v1287 = vmul.f32 %v867, %v1076
  %v1288 = vmul.f32 %v868, %v1081
  %v1289 = vmul.f32 %v869, %v1081
  %v1290 = vmul.f32 %v870, %v1086
  %v1291 = vmul.f32 %v871, %v1086
  %v1292 = vmul.f32 %v872, %v1091
  %v1293 = vmul.f32 %v873, %v1091
  %v1294 = vmul.f32 %v874, %v1096
  %v1295 = vmul.f32 %v875, %v1096
  %v1296 = vmul.f32 %v876, %v1101
  %v1297 = vmul.f32 %v877, %v1101
  %v1298 = vmul.f32 %v878, %v1106
  %v1299 = vmul.f32 %v879, %v1106
  %v1300 = vmul.f32 %v880, %v1111
  %v1301 = vmul.f32 %v881, %v1111
  %v1302 = vmul.f32 %v882, %v1116
  %v1303 = vmul.f32 %v883, %v1116
  %v1304 = vmul.f32 %v884, %v1121
  %v1305 = vmul.f32 %v885, %v1121
  %v1306 = vmul.f32 %v886, %v1126
  %v1307 = vmul.f32 %v887, %v1126
  %v1308 = vmul.f32 %v888, %v1131
  %v1309 = vmul.f32 %v889, %v1131
  %v1310 = vmul.f32 %v890, %v1136
  %v1311 = vmul.f32 %v891, %v1136
  %v1312 = vmul.f32 %v892, %v1141
  %v1313 = vmul.f32 %v893, %v1141
  %v1314 = vmul.f32 %v894, %v1146
  %v1315 = vmul.f32 %v895, %v1146
  %v1316 = vmul.f32 %v896, %v1151
  %v1317 = vmul.f32 %v897, %v1151
  %v1318 = vmul.f32 %v898, %v1156
  %v1319 = vmul.f32 %v899, %v1156
  %v1320 = vmul.f32 %v900, %v1161
  %v1321 = vmul.f32 %v901, %v1161
  %v1322 = vmul.f32 %v902, %v1166
  %v1323 = vmul.f32 %v903, %v1166
  %v1324 = vmul.f32 %v904, %v1171
  %v1325 = vmul.f32 %v905, %v1171
  %v1326 = vmul.f32 %v906, %v1176
  %v1327 = vmul.f32 %v907, %v1176
  %v1328 = vmul.f32 %v908, %v1181
  %v1329 = vmul.f32 %v909, %v1181
  %v1330 = vmul.f32 %v910, %v1186
  %v1331 = vmul.f32 %v911, %v1186
  %v1332 = vmul.f32 %v912, %v1191
  %v1333 = vmul.f32 %v913, %v1191
  %v1334 = vmul.f32 %v914, %v1196
  %v1335 = vmul.f32 %v915, %v1196
  %v1336 = vmul.f32 %v916, %v1201
  %v1337 = vmul.f32 %v917, %v1201
  %v1338 = vmul.f32 %v918, %v1206
  %v1339 = vmul.f32 %v919, %v1206
  %v1340 = vmul.f32 %v920, %v1211
  %v1341 = vmul.f32 %v921, %v1211
  %v1342 = vmul.f32 %v922, %v1216
  %v1343 = vmul.f32 %v923, %v1216
  %v1344 = vmul.f32 %v924, %v1221
  %v1345 = vmul.f32 %v925, %v1221
  %v1346 = vmul.f32 %v926, %v1226
  %v1347 = vmul.f32 %v927, %v1226
  %v1348 = vld [vmem:[%s4] sm:$0xff]
  %v1349 = vld [vmem:[%s4 + $0x8] sm:$0xff]
  %v1350 = vld [vmem:[%s4 + $0x10] sm:$0xff]
  %v1351 = vld [vmem:[%s4 + $0x18] sm:$0xff]
  %v1352 = vld [vmem:[%s4 + $0x20] sm:$0xff]
  %v1353 = vld [vmem:[%s4 + $0x28] sm:$0xff]
  %v1354 = vld [vmem:[%s4 + $0x30] sm:$0xff]
  %v1355 = vld [vmem:[%s4 + $0x38] sm:$0xff]
  %v1356 = vld [vmem:[%s4 + $0x40] sm:$0xff]
  %v1357 = vld [vmem:[%s4 + $0x48] sm:$0xff]
  %v1358 = vld [vmem:[%s4 + $0x50] sm:$0xff]
  %v1359 = vld [vmem:[%s4 + $0x58] sm:$0xff]
  %v1360 = vld [vmem:[%s4 + $0x60] sm:$0xff]
  %v1361 = vld [vmem:[%s4 + $0x68] sm:$0xff]
  %v1362 = vld [vmem:[%s4 + $0x70] sm:$0xff]
  %v1363 = vld [vmem:[%s4 + $0x78] sm:$0xff]
  %v1364 = vld [vmem:[%s4 + $0x80] sm:$0xff]
  %v1365 = vld [vmem:[%s4 + $0x88] sm:$0xff]
  %v1366 = vld [vmem:[%s4 + $0x90] sm:$0xff]
  %v1367 = vld [vmem:[%s4 + $0x98] sm:$0xff]
  %v1368 = vld [vmem:[%s4 + $0xa0] sm:$0xff]
  %v1369 = vld [vmem:[%s4 + $0xa8] sm:$0xff]
  %v1370 = vld [vmem:[%s4 + $0xb0] sm:$0xff]
  %v1371 = vld [vmem:[%s4 + $0xb8] sm:$0xff]
  %v1372 = vld [vmem:[%s4 + $0xc0] sm:$0xff]
  %v1373 = vld [vmem:[%s4 + $0xc8] sm:$0xff]
  %v1374 = vld [vmem:[%s4 + $0xd0] sm:$0xff]
  %v1375 = vld [vmem:[%s4 + $0xd8] sm:$0xff]
  %v1376 = vld [vmem:[%s4 + $0xe0] sm:$0xff]
  %v1377 = vld [vmem:[%s4 + $0xe8] sm:$0xff]
  %v1378 = vld [vmem:[%s4 + $0xf0] sm:$0xff]
  %v1379 = vld [vmem:[%s4 + $0xf8] sm:$0xff]
  %v1380 = vld [vmem:[%s4 + $0x100] sm:$0xff]
  %v1381 = vld [vmem:[%s4 + $0x108] sm:$0xff]
  %v1382 = vld [vmem:[%s4 + $0x110] sm:$0xff]
  %v1383 = vld [vmem:[%s4 + $0x118] sm:$0xff]
  %v1384 = vld [vmem:[%s4 + $0x120] sm:$0xff]
  %v1385 = vld [vmem:[%s4 + $0x128] sm:$0xff]
  %v1386 = vld [vmem:[%s4 + $0x130] sm:$0xff]
  %v1387 = vld [vmem:[%s4 + $0x138] sm:$0xff]
  %vm1388 = vcmask 785408
  %v1390 = vsel %vm1388, %v1351, 0
  %v1393 = vsel %vm1388, %v1355, 0
  %v1396 = vsel %vm1388, %v1359, 0
  %v1399 = vsel %vm1388, %v1363, 0
  %v1402 = vsel %vm1388, %v1367, 0
  %v1405 = vsel %vm1388, %v1371, 0
  %v1408 = vsel %vm1388, %v1375, 0
  %v1411 = vsel %vm1388, %v1379, 0
  %v1414 = vsel %vm1388, %v1383, 0
  %v1417 = vsel %vm1388, %v1387, 0
  %1419 = vmatprep.subr.mxu0 %v1259
  %1420 = vmatpush1.msra.mxu0 %v1258
  %1421 = vmatprep.subr.mxu0 %v1257
  %1422 = vmatpush1.msra.mxu0 %v1256
  %1423 = vmatprep.subr.mxu0 %v1255
  %1424 = vmatpush1.msra.mxu0 %v1254
  %1425 = vmatprep.subr.mxu0 %v1253
  %1426 = vmatpush1.msra.mxu0 %v1252
  %1427 = vmatprep.subr.mxu0 %v1251
  %1428 = vmatpush1.msra.mxu0 %v1250
  %1429 = vmatprep.subr.mxu0 %v1249
  %1430 = vmatpush1.msra.mxu0 %v1248
  %1431 = vmatprep.subr.mxu0 %v1247
  %1432 = vmatpush1.msra.mxu0 %v1246
  %1433 = vmatprep.subr.mxu0 %v1245
  %1434 = vmatpush1.msra.mxu0 %v1244
  %1435 = vmatprep.subr.mxu0 %v1243
  %1436 = vmatpush1.msra.mxu0 %v1242
  %1437 = vmatprep.subr.mxu0 %v1241
  %1438 = vmatpush1.msra.mxu0 %v1240
  %1439 = vmatprep.subr.mxu0 %v1239
  %1440 = vmatpush1.msra.mxu0 %v1238
  %1441 = vmatprep.subr.mxu0 %v1237
  %1442 = vmatpush1.msra.mxu0 %v1236
  %1443 = vmatprep.subr.mxu0 %v1235
  %1444 = vmatpush1.msra.mxu0 %v1234
  %1445 = vmatprep.subr.mxu0 %v1233
  %1446 = vmatpush1.msra.mxu0 %v1232
  %1447 = vmatprep.subr.mxu0 %v1231
  %1448 = vmatpush1.msra.mxu0 %v1230
  %1449 = vmatprep.subr.mxu0 %v1229
  %1450 = vmatpush1.msra.mxu0 %v1228
  %1451 = vmatprep.subr.mxu0 %v1291
  %1452 = vmatpush2.msra.mxu0 %v1290
  %1453 = vmatprep.subr.mxu0 %v1289
  %1454 = vmatpush2.msra.mxu0 %v1288
  %1455 = vmatprep.subr.mxu0 %v1287
  %1456 = vmatpush2.msra.mxu0 %v1286
  %1457 = vmatprep.subr.mxu0 %v1285
  %1458 = vmatpush2.msra.mxu0 %v1284
  %1459 = vmatprep.subr.mxu0 %v1283
  %1460 = vmatpush2.msra.mxu0 %v1282
  %1461 = vmatprep.subr.mxu0 %v1281
  %1462 = vmatpush2.msra.mxu0 %v1280
  %1463 = vmatprep.subr.mxu0 %v1279
  %1464 = vmatpush2.msra.mxu0 %v1278
  %1465 = vmatprep.subr.mxu0 %v1277
  %1466 = vmatpush2.msra.mxu0 %v1276
  %1467 = vmatprep.subr.mxu0 %v1275
  %1468 = vmatpush2.msra.mxu0 %v1274
  %1469 = vmatprep.subr.mxu0 %v1273
  %1470 = vmatpush2.msra.mxu0 %v1272
  %1471 = vmatprep.subr.mxu0 %v1271
  %1472 = vmatpush2.msra.mxu0 %v1270
  %1473 = vmatprep.subr.mxu0 %v1269
  %1474 = vmatpush2.msra.mxu0 %v1268
  %1475 = vmatprep.subr.mxu0 %v1267
  %1476 = vmatpush2.msra.mxu0 %v1266
  %1477 = vmatprep.subr.mxu0 %v1265
  %1478 = vmatpush2.msra.mxu0 %v1264
  %1479 = vmatprep.subr.mxu0 %v1263
  %1480 = vmatpush2.msra.mxu0 %v1262
  %1481 = vmatprep.subr.mxu0 %v1261
  %1482 = vmatpush2.msra.mxu0 %v1260
  %1483 = vmatprep.mubr.f32.mxu0 %v1349
  %1484 = vmatmul.mubr.f32.gmra.mxu0 %v1348
  %v1485 = vpop.f32.mrf.mxu0
  %v1486 = vadd.f32 0.0, %v1485
  %v1487 = vpop.f32.mrf.mxu0
  %v1488 = vadd.f32 0.0, %v1487
  %1489 = vmatprep.mubr.f32.mxu0 %v1353
  %1490 = vmatmul.mubr.f32.gmra.mxu0 %v1352
  %v1491 = vpop.f32.mrf.mxu0
  %v1492 = vadd.f32 0.0, %v1491
  %v1493 = vpop.f32.mrf.mxu0
  %v1494 = vadd.f32 0.0, %v1493
  %1495 = vmatprep.mubr.f32.mxu0 %v1357
  %1496 = vmatmul.mubr.f32.gmra.mxu0 %v1356
  %v1497 = vpop.f32.mrf.mxu0
  %v1498 = vadd.f32 0.0, %v1497
  %v1499 = vpop.f32.mrf.mxu0
  %v1500 = vadd.f32 0.0, %v1499
  %1501 = vmatprep.mubr.f32.mxu0 %v1361
  %1502 = vmatmul.mubr.f32.gmra.mxu0 %v1360
  %v1503 = vpop.f32.mrf.mxu0
  %v1504 = vadd.f32 0.0, %v1503
  %v1505 = vpop.f32.mrf.mxu0
  %v1506 = vadd.f32 0.0, %v1505
  %1507 = vmatprep.mubr.f32.mxu0 %v1365
  %1508 = vmatmul.mubr.f32.gmra.mxu0 %v1364
  %v1509 = vpop.f32.mrf.mxu0
  %v1510 = vadd.f32 0.0, %v1509
  %v1511 = vpop.f32.mrf.mxu0
  %v1512 = vadd.f32 0.0, %v1511
  %1513 = vmatprep.mubr.f32.mxu0 %v1369
  %1514 = vmatmul.mubr.f32.gmra.mxu0 %v1368
  %v1515 = vpop.f32.mrf.mxu0
  %v1516 = vadd.f32 0.0, %v1515
  %v1517 = vpop.f32.mrf.mxu0
  %v1518 = vadd.f32 0.0, %v1517
  %1519 = vmatprep.mubr.f32.mxu0 %v1373
  %1520 = vmatmul.mubr.f32.gmra.mxu0 %v1372
  %v1521 = vpop.f32.mrf.mxu0
  %v1522 = vadd.f32 0.0, %v1521
  %v1523 = vpop.f32.mrf.mxu0
  %v1524 = vadd.f32 0.0, %v1523
  %1525 = vmatprep.mubr.f32.mxu0 %v1377
  %1526 = vmatmul.mubr.f32.gmra.mxu0 %v1376
  %v1527 = vpop.f32.mrf.mxu0
  %v1528 = vadd.f32 0.0, %v1527
  %v1529 = vpop.f32.mrf.mxu0
  %v1530 = vadd.f32 0.0, %v1529
  %1531 = vmatprep.mubr.f32.mxu0 %v1381
  %1532 = vmatmul.mubr.f32.gmra.mxu0 %v1380
  %v1533 = vpop.f32.mrf.mxu0
  %v1534 = vadd.f32 0.0, %v1533
  %v1535 = vpop.f32.mrf.mxu0
  %v1536 = vadd.f32 0.0, %v1535
  %1537 = vmatprep.mubr.f32.mxu0 %v1385
  %1538 = vmatmul.mubr.f32.gmra.mxu0 %v1384
  %v1539 = vpop.f32.mrf.mxu0
  %v1540 = vadd.f32 0.0, %v1539
  %v1541 = vpop.f32.mrf.mxu0
  %v1542 = vadd.f32 0.0, %v1541
  %1543 = vdwg.mxu0
  %1544 = vmatprep.subr.mxu0 %v1323
  %1545 = vmatpush1.msra.mxu0 %v1322
  %1546 = vmatprep.subr.mxu0 %v1321
  %1547 = vmatpush1.msra.mxu0 %v1320
  %1548 = vmatprep.subr.mxu0 %v1319
  %1549 = vmatpush1.msra.mxu0 %v1318
  %1550 = vmatprep.subr.mxu0 %v1317
  %1551 = vmatpush1.msra.mxu0 %v1316
  %1552 = vmatprep.subr.mxu0 %v1315
  %1553 = vmatpush1.msra.mxu0 %v1314
  %1554 = vmatprep.subr.mxu0 %v1313
  %1555 = vmatpush1.msra.mxu0 %v1312
  %1556 = vmatprep.subr.mxu0 %v1311
  %1557 = vmatpush1.msra.mxu0 %v1310
  %1558 = vmatprep.subr.mxu0 %v1309
  %1559 = vmatpush1.msra.mxu0 %v1308
  %1560 = vmatprep.subr.mxu0 %v1307
  %1561 = vmatpush1.msra.mxu0 %v1306
  %1562 = vmatprep.subr.mxu0 %v1305
  %1563 = vmatpush1.msra.mxu0 %v1304
  %1564 = vmatprep.subr.mxu0 %v1303
  %1565 = vmatpush1.msra.mxu0 %v1302
  %1566 = vmatprep.subr.mxu0 %v1301
  %1567 = vmatpush1.msra.mxu0 %v1300
  %1568 = vmatprep.subr.mxu0 %v1299
  %1569 = vmatpush1.msra.mxu0 %v1298
  %1570 = vmatprep.subr.mxu0 %v1297
  %1571 = vmatpush1.msra.mxu0 %v1296
  %1572 = vmatprep.subr.mxu0 %v1295
  %1573 = vmatpush1.msra.mxu0 %v1294
  %1574 = vmatprep.subr.mxu0 %v1293
  %1575 = vmatpush1.msra.mxu0 %v1292
  %1576 = vmatprep.subr.mxu0 0.0
  %1577 = vmatpush2.msra.mxu0 0.0
  %1578 = vmatprep.subr.mxu0 0.0
  %1579 = vmatpush2.msra.mxu0 0.0
  %1580 = vmatprep.subr.mxu0 0.0
  %1581 = vmatpush2.msra.mxu0 0.0
  %1582 = vmatprep.subr.mxu0 0.0
  %1583 = vmatpush2.msra.mxu0 0.0
  %1584 = vmatprep.subr.mxu0 %v1347
  %1585 = vmatpush2.msra.mxu0 %v1346
  %1586 = vmatprep.subr.mxu0 %v1345
  %1587 = vmatpush2.msra.mxu0 %v1344
  %1588 = vmatprep.subr.mxu0 %v1343
  %1589 = vmatpush2.msra.mxu0 %v1342
  %1590 = vmatprep.subr.mxu0 %v1341
  %1591 = vmatpush2.msra.mxu0 %v1340
  %1592 = vmatprep.subr.mxu0 %v1339
  %1593 = vmatpush2.msra.mxu0 %v1338
  %1594 = vmatprep.subr.mxu0 %v1337
  %1595 = vmatpush2.msra.mxu0 %v1336
  %1596 = vmatprep.subr.mxu0 %v1335
  %1597 = vmatpush2.msra.mxu0 %v1334
  %1598 = vmatprep.subr.mxu0 %v1333
  %1599 = vmatpush2.msra.mxu0 %v1332
  %1600 = vmatprep.subr.mxu0 %v1331
  %1601 = vmatpush2.msra.mxu0 %v1330
  %1602 = vmatprep.subr.mxu0 %v1329
  %1603 = vmatpush2.msra.mxu0 %v1328
  %1604 = vmatprep.subr.mxu0 %v1327
  %1605 = vmatpush2.msra.mxu0 %v1326
  %1606 = vmatprep.subr.mxu0 %v1325
  %1607 = vmatpush2.msra.mxu0 %v1324
  %1608 = vmatprep.mubr.f32.mxu0 %v1390
  %1609 = vmatmul.mubr.f32.gmra.mxu0 %v1350
  %v1610 = vpop.f32.mrf.mxu0
  %v1611 = vadd.f32 %v1486, %v1610
  %v1612 = vpop.f32.mrf.mxu0
  %v1613 = vadd.f32 %v1488, %v1612
  %1614 = vmatprep.mubr.f32.mxu0 %v1393
  %1615 = vmatmul.mubr.f32.gmra.mxu0 %v1354
  %v1616 = vpop.f32.mrf.mxu0
  %v1617 = vadd.f32 %v1492, %v1616
  %v1618 = vpop.f32.mrf.mxu0
  %v1619 = vadd.f32 %v1494, %v1618
  %1620 = vmatprep.mubr.f32.mxu0 %v1396
  %1621 = vmatmul.mubr.f32.gmra.mxu0 %v1358
  %v1622 = vpop.f32.mrf.mxu0
  %v1623 = vadd.f32 %v1498, %v1622
  %v1624 = vpop.f32.mrf.mxu0
  %v1625 = vadd.f32 %v1500, %v1624
  %1626 = vmatprep.mubr.f32.mxu0 %v1399
  %1627 = vmatmul.mubr.f32.gmra.mxu0 %v1362
  %v1628 = vpop.f32.mrf.mxu0
  %v1629 = vadd.f32 %v1504, %v1628
  %v1630 = vpop.f32.mrf.mxu0
  %v1631 = vadd.f32 %v1506, %v1630
  %1632 = vmatprep.mubr.f32.mxu0 %v1402
  %1633 = vmatmul.mubr.f32.gmra.mxu0 %v1366
  %v1634 = vpop.f32.mrf.mxu0
  %v1635 = vadd.f32 %v1510, %v1634
  %v1636 = vpop.f32.mrf.mxu0
  %v1637 = vadd.f32 %v1512, %v1636
  %1638 = vmatprep.mubr.f32.mxu0 %v1405
  %1639 = vmatmul.mubr.f32.gmra.mxu0 %v1370
  %v1640 = vpop.f32.mrf.mxu0
  %v1641 = vadd.f32 %v1516, %v1640
  %v1642 = vpop.f32.mrf.mxu0
  %v1643 = vadd.f32 %v1518, %v1642
  %1644 = vmatprep.mubr.f32.mxu0 %v1408
  %1645 = vmatmul.mubr.f32.gmra.mxu0 %v1374
  %v1646 = vpop.f32.mrf.mxu0
  %v1647 = vadd.f32 %v1522, %v1646
  %v1648 = vpop.f32.mrf.mxu0
  %v1649 = vadd.f32 %v1524, %v1648
  %1650 = vmatprep.mubr.f32.mxu0 %v1411
  %1651 = vmatmul.mubr.f32.gmra.mxu0 %v1378
  %v1652 = vpop.f32.mrf.mxu0
  %v1653 = vadd.f32 %v1528, %v1652
  %v1654 = vpop.f32.mrf.mxu0
  %v1655 = vadd.f32 %v1530, %v1654
  %1656 = vmatprep.mubr.f32.mxu0 %v1414
  %1657 = vmatmul.mubr.f32.gmra.mxu0 %v1382
  %v1658 = vpop.f32.mrf.mxu0
  %v1659 = vadd.f32 %v1534, %v1658
  %v1660 = vpop.f32.mrf.mxu0
  %v1661 = vadd.f32 %v1536, %v1660
  %1662 = vmatprep.mubr.f32.mxu0 %v1417
  %1663 = vmatmul.mubr.f32.gmra.mxu0 %v1386
  %v1664 = vpop.f32.mrf.mxu0
  %v1665 = vadd.f32 %v1540, %v1664
  %v1666 = vpop.f32.mrf.mxu0
  %v1667 = vadd.f32 %v1542, %v1666
  %1668 = vdwg.mxu0
  %1669 = vst [vmem:[%s5] sm:$0xff] %v1611
  %vm1670 = vcmask 556032
  %1671 = vst.msk [vmem:[%s5 + $0x8] sm:$0xff] %vm1670, %v1613
  %1672 = vst [vmem:[%s5 + $0x10] sm:$0xff] %v1617
  %1673 = vst.msk [vmem:[%s5 + $0x18] sm:$0xff] %vm1670, %v1619
  %1674 = vst [vmem:[%s5 + $0x20] sm:$0xff] %v1623
  %1675 = vst.msk [vmem:[%s5 + $0x28] sm:$0xff] %vm1670, %v1625
  %1676 = vst [vmem:[%s5 + $0x30] sm:$0xff] %v1629
  %1677 = vst.msk [vmem:[%s5 + $0x38] sm:$0xff] %vm1670, %v1631
  %1678 = vst [vmem:[%s5 + $0x40] sm:$0xff] %v1635
  %1679 = vst.msk [vmem:[%s5 + $0x48] sm:$0xff] %vm1670, %v1637
  %1680 = vst [vmem:[%s5 + $0x50] sm:$0xff] %v1641
  %1681 = vst.msk [vmem:[%s5 + $0x58] sm:$0xff] %vm1670, %v1643
  %1682 = vst [vmem:[%s5 + $0x60] sm:$0xff] %v1647
  %1683 = vst.msk [vmem:[%s5 + $0x68] sm:$0xff] %vm1670, %v1649
  %1684 = vst [vmem:[%s5 + $0x70] sm:$0xff] %v1653
  %1685 = vst.msk [vmem:[%s5 + $0x78] sm:$0xff] %vm1670, %v1655
  %1686 = vst [vmem:[%s5 + $0x80] sm:$0xff] %v1659
  %1687 = vst.msk [vmem:[%s5 + $0x88] sm:$0xff] %vm1670, %v1661
  %1688 = vst [vmem:[%s5 + $0x90] sm:$0xff] %v1665
  %1689 = vst.msk [vmem:[%s5 + $0x98] sm:$0xff] %vm1670, %v1667
  // Predicated region
  $region22: #{se_conv_pallas.1} parent=0 // pred_check
    _
  $region23: #{se_conv_pallas.1} parent=0 // pred_check_branch
    %1691 = sbr.rel (0) target = $region25
  $region24: #{se_conv_pallas.1} parent=0 // pred_region
    _
  $region25: #{se_conv_pallas.1} parent=0 // pred_fallthru
    _
  // Predicated region
  $region26: #{se_conv_pallas.1} parent=0 // pred_check
    _
  $region27: #{se_conv_pallas.1} parent=0 // pred_check_branch
    %1693 = sbr.rel (0) target = $region29
  $region28: #{se_conv_pallas.1} parent=0 // pred_region
    _
  $region29: #{se_conv_pallas.1} parent=0 // pred_fallthru
    _

</llo_original>
